<compile_context>
chip_gen: v7x
topology: tpu7x:2x2x1
jax: 0.10.0
libtpu: 0.0.40
codegen_flags: <defaults>
</compile_context>

<pallas_src>
import functools

import jax
import jax.numpy as jnp
from jax.experimental import pallas as pl
from jax.experimental.pallas import tpu as pltpu


def _round_up(x, m):
    return ((x + m - 1) // m) * m


def _head_kernel(x_ref, w1_ref, b1_ref, w2_ref, b2_ref, wh_ref, bh_ref,
                 out_ref, acc_ref, *, n_cls):
    """Fused box head.

    Grid = (M tiles, K tiles).  K (= d_in) is a reduction axis: the first
    linear layer is accumulated into acc_ref across K steps; on the last K
    step the rest of the head (linear2+ReLU, fused cls|bbox matmul, masked
    softmax) runs and writes one lane-dense output tile.

      x_ref   : (TM, TK)        bf16  flattened pooled-feature tile
      w1_ref  : (TK, H)         bf16  K-streamed block of linear1 weight
      b1/b2   : (1, H)          f32
      w2_ref  : (H, H)          bf16
      wh_ref  : (H, NOUT_PAD)   bf16  [wc | wb | 0-pad]
      bh_ref  : (1, NOUT_PAD)   f32   [bc | bb | 0-pad]
      out_ref : (TM, NOUT_PAD)  f32   cols [0,n_cls) = softmax probs,
                                      cols [n_cls,5*n_cls) = bbox preds
      acc_ref : (TM, H)         f32 scratch accumulator
    """
    k = pl.program_id(1)

    @pl.when(k == 0)
    def _():
        acc_ref[...] = jnp.zeros_like(acc_ref)

    # linear1 partial product over this K block (bf16 in, f32 accumulate).
    acc_ref[...] += jnp.dot(x_ref[...], w1_ref[...],
                            preferred_element_type=jnp.float32)

    @pl.when(k == pl.num_programs(1) - 1)
    def _():
        # linear1 bias + ReLU (dropout = identity in eval mode)
        h1 = jnp.maximum(acc_ref[...] + b1_ref[...], 0.0)

        # linear2 + ReLU
        h2 = jnp.dot(h1.astype(w2_ref.dtype), w2_ref[...],
                     preferred_element_type=jnp.float32) + b2_ref[...]
        h2 = jnp.maximum(h2, 0.0)

        # fused cls|bbox matmul (single lane-dense MXU pass + store)
        logits = jnp.dot(h2.astype(wh_ref.dtype), wh_ref[...],
                         preferred_element_type=jnp.float32) + bh_ref[...]

        # masked softmax over the first n_cls columns only
        col = jax.lax.broadcasted_iota(jnp.int32, logits.shape, 1)
        is_cls = col < n_cls
        cls_logits = jnp.where(is_cls, logits, -jnp.inf)
        m = jnp.max(cls_logits, axis=-1, keepdims=True)
        e = jnp.where(is_cls, jnp.exp(cls_logits - m), 0.0)
        denom = jnp.sum(e, axis=-1, keepdims=True)
        probs = e * pl.reciprocal(denom, approx=True)

        # cls columns -> probabilities, remaining columns -> raw bbox preds
        out_ref[...] = jnp.where(is_cls, probs, logits)


@functools.partial(jax.jit, static_argnames=("tile_m", "tile_k"))
def faster_rcnn_head(feats_pooled, params, *, tile_m=128, tile_k=512):
    """feats_pooled: (num_rois, C, 7, 7) float32 NCHW pooled ROI features."""
    n_rois = feats_pooled.shape[0]
    # flatten exactly like feats_pooled.view(N, -1) on NCHW
    x = feats_pooled.reshape(n_rois, -1).astype(jnp.float32)
    d_in = x.shape[1]

    w1, b1 = params["w1"], params["b1"]
    w2, b2 = params["w2"], params["b2"]
    wc, bc = params["wc"], params["bc"]
    wb, bb = params["wb"], params["bb"]
    hidden = w1.shape[1]
    n_cls = wc.shape[1]
    n_out = n_cls + 4 * n_cls

    # ---- tiling / padding -------------------------------------------------
    # Large M tile (MXU occupancy); when n_rois is small process all rows in
    # one step.  K (d_in) is blocked so w1 is streamed, never fully resident.
    tile_m_eff = min(tile_m, _round_up(n_rois, 8))
    tile_k_eff = min(tile_k, _round_up(d_in, 128))
    n_rois_pad = _round_up(n_rois, tile_m_eff)
    d_in_pad = _round_up(d_in, tile_k_eff)
    n_out_pad = _round_up(n_out, 128)          # lane-dense output width

    # MXU operands in bf16; biases / accumulation / softmax stay f32.
    x_p = jnp.pad(x, ((0, n_rois_pad - n_rois),
                      (0, d_in_pad - d_in))).astype(jnp.bfloat16)
    w1_p = jnp.pad(w1, ((0, d_in_pad - d_in), (0, 0))).astype(jnp.bfloat16)
    w2_b = w2.astype(jnp.bfloat16)
    wh = jnp.pad(jnp.concatenate([wc, wb], axis=1),
                 ((0, 0), (0, n_out_pad - n_out))).astype(jnp.bfloat16)
    bh = jnp.pad(jnp.concatenate([bc, bb], axis=1),
                 ((0, 0), (0, n_out_pad - n_out))).astype(jnp.float32)
    b1_f = b1.astype(jnp.float32)
    b2_f = b2.astype(jnp.float32)

    grid = (n_rois_pad // tile_m_eff, d_in_pad // tile_k_eff)
    rep = lambda i, k: (0, 0)   # grid-invariant operands

    out = pl.pallas_call(
        functools.partial(_head_kernel, n_cls=n_cls),
        grid=grid,
        in_specs=[
            pl.BlockSpec((tile_m_eff, tile_k_eff), lambda i, k: (i, k)),  # x
            pl.BlockSpec((tile_k_eff, hidden), lambda i, k: (k, 0)),      # w1 (K-streamed)
            pl.BlockSpec((1, hidden), rep),                               # b1
            pl.BlockSpec((hidden, hidden), rep,
                         pipeline_mode=pl.Buffered(1)),                   # w2 (resident)
            pl.BlockSpec((1, hidden), rep),                               # b2
            pl.BlockSpec((hidden, n_out_pad), rep,
                         pipeline_mode=pl.Buffered(1)),                   # wc|wb fused
            pl.BlockSpec((1, n_out_pad), rep),                            # bc|bb fused
        ],
        out_specs=pl.BlockSpec((tile_m_eff, n_out_pad), lambda i, k: (i, 0)),
        out_shape=jax.ShapeDtypeStruct((n_rois_pad, n_out_pad), jnp.float32),
        scratch_shapes=[pltpu.VMEM((tile_m_eff, hidden), jnp.float32)],
        compiler_params=pltpu.CompilerParams(
            dimension_semantics=("parallel", "arbitrary"),
            vmem_limit_bytes=64 * 1024 * 1024),
    )(x_p, w1_p, b1_f, w2_b, b2_f, wh, bh)

    cls_prob = out[:n_rois, :n_cls]
    bbox_pred = out[:n_rois, n_cls:n_out]
    return cls_prob, bbox_pred


def init_params(key, d_in, hidden, n_classes):
    """Deterministic synthetic parameters (shapes follow Faster_RCNN.__init__,
    scaled down: 512*7*7 -> C*7*7, 4096 -> hidden)."""
    ks = jax.random.split(key, 8)
    ws, bs = 0.02, 0.01
    return {
        "w1": ws * jax.random.normal(ks[0], (d_in, hidden), jnp.float32),
        "b1": bs * jax.random.normal(ks[1], (1, hidden), jnp.float32),
        "w2": ws * jax.random.normal(ks[2], (hidden, hidden), jnp.float32),
        "b2": bs * jax.random.normal(ks[3], (1, hidden), jnp.float32),
        "wc": ws * jax.random.normal(ks[4], (hidden, n_classes), jnp.float32),
        "bc": bs * jax.random.normal(ks[5], (1, n_classes), jnp.float32),
        "wb": ws * jax.random.normal(ks[6], (hidden, 4 * n_classes), jnp.float32),
        "bb": bs * jax.random.normal(ks[7], (1, 4 * n_classes), jnp.float32),
    }


if __name__ == "__main__":
    key = jax.random.PRNGKey(0)

    # small shapes consistent with the forward pass
    batch_size = 2          # len(feed_dicts) in the reference
    rois_per_image = 8      # rois.size(1)
    n_rois = batch_size * rois_per_image
    C, P = 32, 7            # pooled channels (512 in the original) x 7x7
    hidden = 256            # 4096 in the original
    n_classes = 5           # background + 4 classes

    k_feat, k_param = jax.random.split(key)
    # synthetic ROI-pooled features (stand-in for base+rpn+roi_pool), NCHW
    feats_pooled = jax.random.normal(k_feat, (n_rois, C, P, P), jnp.float32)
    params = init_params(k_param, C * P * P, hidden, n_classes)

    cls_flat, bbox_flat = faster_rcnn_head(feats_pooled, params)
    jax.block_until_ready((cls_flat, bbox_flat))

    # cls_prob.view(batch, rois, -1), bbox_pred.view(batch, rois, -1)
    cls_prob = cls_flat.reshape(batch_size, rois_per_image, -1)
    bbox_pred = bbox_flat.reshape(batch_size, rois_per_image, -1)
    rois_data = None  # inference branch of the reference forward

    # pure-JAX f32 reference of the same head (bf16 matmuls => loose tolerance)
    x = feats_pooled.reshape(n_rois, -1)
    h1 = jax.nn.relu(x @ params["w1"] + params["b1"])
    h2 = jax.nn.relu(h1 @ params["w2"] + params["b2"])
    cls_ref = jax.nn.softmax(h2 @ params["wc"] + params["bc"], axis=-1)
    bbox_ref = h2 @ params["wb"] + params["bb"]

    assert cls_prob.shape == (batch_size, rois_per_image, n_classes)
    assert bbox_pred.shape == (batch_size, rois_per_image, 4 * n_classes)
    assert jnp.allclose(jnp.sum(cls_prob, axis=-1), 1.0, atol=5e-3)
    assert jnp.allclose(cls_flat, cls_ref, atol=2e-2)
    assert jnp.allclose(bbox_flat, bbox_ref, atol=2e-2)

    print("KERNEL_OK")
</pallas_src>

<mosaic_0001>
module attributes {stable_mosaic.version = 11 : i64} {
  func.func @_head_kernel(%arg0: i32, %arg1: i32, %arg2: memref<16x512xbf16, #tpu.memory_space<vmem>>, %arg3: memref<512x256xbf16, #tpu.memory_space<vmem>>, %arg4: memref<1x256xf32, #tpu.memory_space<vmem>>, %arg5: memref<256x256xbf16, #tpu.memory_space<vmem>>, %arg6: memref<1x256xf32, #tpu.memory_space<vmem>>, %arg7: memref<256x128xbf16, #tpu.memory_space<vmem>>, %arg8: memref<1x128xf32, #tpu.memory_space<vmem>>, %arg9: memref<16x128xf32, #tpu.memory_space<vmem>>, %arg10: memref<16x256xf32, #tpu.memory_space<vmem>>) attributes {dimension_semantics = [#tpu.dimension_semantics<parallel>, #tpu.dimension_semantics<arbitrary>], iteration_bounds = array<i64: 1, 4>, scalar_prefetch = 0 : i64, scratch_operands = 1 : i64, tpu.core_type = #tpu.core_type<tc>, window_params = [{transform_indices = @transform_0, window_bounds = array<i64: 16, 512>}, {transform_indices = @transform_1, window_bounds = array<i64: 512, 256>}, {pipeline_mode = #tpu.pipeline_mode<synchronous>, transform_indices = @transform_2, window_bounds = array<i64: 1, 256>}, {pipeline_mode = #tpu.pipeline_mode<synchronous>, transform_indices = @transform_3, window_bounds = array<i64: 256, 256>}, {pipeline_mode = #tpu.pipeline_mode<synchronous>, transform_indices = @transform_4, window_bounds = array<i64: 1, 256>}, {pipeline_mode = #tpu.pipeline_mode<synchronous>, transform_indices = @transform_5, window_bounds = array<i64: 256, 128>}, {pipeline_mode = #tpu.pipeline_mode<synchronous>, transform_indices = @transform_6, window_bounds = array<i64: 1, 128>}, {transform_indices = @transform_7, window_bounds = array<i64: 16, 128>}]} {
    %c0_i32 = arith.constant 0 : i32
    %0 = arith.cmpi eq, %arg1, %c0_i32 : i32
    %1 = arith.extui %0 : i1 to i32
    %c0_i32_0 = arith.constant 0 : i32
    %2 = arith.cmpi ne, %1, %c0_i32_0 : i32
    scf.if %2 {
      %cst_9 = arith.constant 0.000000e+00 : f32
      %12 = vector.broadcast %cst_9 : f32 to vector<16x256xf32>
      %c0_10 = arith.constant 0 : index
      %c0_11 = arith.constant 0 : index
      %13 = vector.load %arg10[%c0_10, %c0_11] : memref<16x256xf32, #tpu.memory_space<vmem>>, vector<16x256xf32>
      tpu.vector_store %arg10[%c0_10, %c0_11], %12 {strides = array<i32>} : memref<16x256xf32, #tpu.memory_space<vmem>>, vector<16x256xf32>,
    } else {
    }
    %c0 = arith.constant 0 : index
    %c0_1 = arith.constant 0 : index
    %3 = vector.load %arg10[%c0, %c0_1] : memref<16x256xf32, #tpu.memory_space<vmem>>, vector<16x256xf32>
    %c0_2 = arith.constant 0 : index
    %c0_3 = arith.constant 0 : index
    %4 = vector.load %arg2[%c0_2, %c0_3] : memref<16x512xbf16, #tpu.memory_space<vmem>>, vector<16x512xbf16>
    %c0_4 = arith.constant 0 : index
    %c0_5 = arith.constant 0 : index
    %5 = vector.load %arg3[%c0_4, %c0_5] : memref<512x256xbf16, #tpu.memory_space<vmem>>, vector<512x256xbf16>
    %cst = arith.constant dense<0.000000e+00> : vector<16x256xf32>
    %6 = tpu.matmul %4, %5, %cst {dimension_numbers = #tpu.dot_dimension_numbers<[1], [0], [0], [1], [0, 0, 1, 1], [], []>} : vector<16x512xbf16>, vector<512x256xbf16>, vector<16x256xf32> -> vector<16x256xf32>
    %7 = arith.addf %3, %6 : vector<16x256xf32>
    %c0_6 = arith.constant 0 : index
    %c0_7 = arith.constant 0 : index
    %8 = vector.load %arg10[%c0_6, %c0_7] : memref<16x256xf32, #tpu.memory_space<vmem>>, vector<16x256xf32>
    tpu.vector_store %arg10[%c0_6, %c0_7], %7 {strides = array<i32>} : memref<16x256xf32, #tpu.memory_space<vmem>>, vector<16x256xf32>,
    %c3_i32 = arith.constant 3 : i32
    %9 = arith.cmpi eq, %arg1, %c3_i32 : i32
    %10 = arith.extui %9 : i1 to i32
    %c0_i32_8 = arith.constant 0 : i32
    %11 = arith.cmpi ne, %10, %c0_i32_8 : i32
    scf.if %11 {
      %c0_9 = arith.constant 0 : index
      %c0_10 = arith.constant 0 : index
      %12 = vector.load %arg10[%c0_9, %c0_10] : memref<16x256xf32, #tpu.memory_space<vmem>>, vector<16x256xf32>
      %c0_11 = arith.constant 0 : index
      %c0_12 = arith.constant 0 : index
      %13 = vector.load %arg4[%c0_11, %c0_12] : memref<1x256xf32, #tpu.memory_space<vmem>>, vector<1x256xf32>
      %14 = vector.broadcast %13 : vector<1x256xf32> to vector<16x256xf32>
      %15 = arith.addf %12, %14 : vector<16x256xf32>
      %cst_13 = arith.constant 0.000000e+00 : f32
      %16 = vector.broadcast %cst_13 : f32 to vector<16x256xf32>
      %17 = arith.maximumf %15, %16 : vector<16x256xf32>
      %18 = arith.truncf %17 : vector<16x256xf32> to vector<16x256xbf16>
      %c0_14 = arith.constant 0 : index
      %c0_15 = arith.constant 0 : index
      %19 = vector.load %arg5[%c0_14, %c0_15] : memref<256x256xbf16, #tpu.memory_space<vmem>>, vector<256x256xbf16>
      %cst_16 = arith.constant dense<0.000000e+00> : vector<16x256xf32>
      %20 = tpu.matmul %18, %19, %cst_16 {dimension_numbers = #tpu.dot_dimension_numbers<[1], [0], [0], [1], [0, 0, 1, 1], [], []>} : vector<16x256xbf16>, vector<256x256xbf16>, vector<16x256xf32> -> vector<16x256xf32>
      %c0_17 = arith.constant 0 : index
      %c0_18 = arith.constant 0 : index
      %21 = vector.load %arg6[%c0_17, %c0_18] : memref<1x256xf32, #tpu.memory_space<vmem>>, vector<1x256xf32>
      %22 = vector.broadcast %21 : vector<1x256xf32> to vector<16x256xf32>
      %23 = arith.addf %20, %22 : vector<16x256xf32>
      %cst_19 = arith.constant 0.000000e+00 : f32
      %24 = vector.broadcast %cst_19 : f32 to vector<16x256xf32>
      %25 = arith.maximumf %23, %24 : vector<16x256xf32>
      %26 = arith.truncf %25 : vector<16x256xf32> to vector<16x256xbf16>
      %c0_20 = arith.constant 0 : index
      %c0_21 = arith.constant 0 : index
      %27 = vector.load %arg7[%c0_20, %c0_21] : memref<256x128xbf16, #tpu.memory_space<vmem>>, vector<256x128xbf16>
      %cst_22 = arith.constant dense<0.000000e+00> : vector<16x128xf32>
      %28 = tpu.matmul %26, %27, %cst_22 {dimension_numbers = #tpu.dot_dimension_numbers<[1], [0], [0], [1], [0, 0, 1, 1], [], []>} : vector<16x256xbf16>, vector<256x128xbf16>, vector<16x128xf32> -> vector<16x128xf32>
      %c0_23 = arith.constant 0 : index
      %c0_24 = arith.constant 0 : index
      %29 = vector.load %arg8[%c0_23, %c0_24] : memref<1x128xf32, #tpu.memory_space<vmem>>, vector<1x128xf32>
      %30 = vector.broadcast %29 : vector<1x128xf32> to vector<16x128xf32>
      %31 = arith.addf %28, %30 : vector<16x128xf32>
      %32 = tpu.iota {dimensions = array<i32: 1>} : vector<16x128xi32>
      %c5_i32 = arith.constant 5 : i32
      %33 = vector.broadcast %c5_i32 : i32 to vector<16x128xi32>
      %34 = arith.cmpi slt, %32, %33 : vector<16x128xi32>
      %cst_25 = arith.constant 0xFF800000 : f32
      %35 = vector.broadcast %cst_25 : f32 to vector<16x128xf32>
      %36 = arith.select %34, %31, %35 : vector<16x128xi1>, vector<16x128xf32>
      %cst_26 = arith.constant dense<0xFF800000> : vector<16xf32>
      %37 = vector.multi_reduction <maximumf>, %36, %cst_26 [1] : vector<16x128xf32> to vector<16xf32>
      %38 = vector.shape_cast %37 : vector<16xf32> to vector<16x1xf32>
      %39 = vector.broadcast %38 : vector<16x1xf32> to vector<16x128xf32>
      %40 = arith.subf %36, %39 : vector<16x128xf32>
      %41 = math.exp %40 : vector<16x128xf32>
      %cst_27 = arith.constant 0.000000e+00 : f32
      %42 = vector.broadcast %cst_27 : f32 to vector<16x128xf32>
      %43 = arith.select %34, %41, %42 : vector<16x128xi1>, vector<16x128xf32>
      %cst_28 = arith.constant dense<0.000000e+00> : vector<16xf32>
      %44 = vector.multi_reduction <add>, %43, %cst_28 [1] : vector<16x128xf32> to vector<16xf32>
      %45 = vector.shape_cast %44 : vector<16xf32> to vector<16x1xf32>
      %46 = tpu.reciprocal %45 {approx = true} : vector<16x1xf32> -> vector<16x1xf32>
      %47 = vector.broadcast %46 : vector<16x1xf32> to vector<16x128xf32>
      %48 = arith.mulf %43, %47 : vector<16x128xf32>
      %49 = arith.select %34, %48, %31 : vector<16x128xi1>, vector<16x128xf32>
      %c0_29 = arith.constant 0 : index
      %c0_30 = arith.constant 0 : index
      %50 = vector.load %arg9[%c0_29, %c0_30] : memref<16x128xf32, #tpu.memory_space<vmem>>, vector<16x128xf32>
      tpu.vector_store %arg9[%c0_29, %c0_30], %49 {strides = array<i32>} : memref<16x128xf32, #tpu.memory_space<vmem>>, vector<16x128xf32>,
    } else {
    }
    return
  }
  func.func @transform_0(%arg0: i32, %arg1: i32) -> (i32, i32) {
    %c0_i32 = arith.constant 0 : i32
    return %arg0, %arg1 : i32, i32
  }
  func.func @transform_1(%arg0: i32, %arg1: i32) -> (i32, i32) {
    %c0_i32 = arith.constant 0 : i32
    %c0_i32_0 = arith.constant 0 : i32
    return %arg1, %c0_i32 : i32, i32
  }
  func.func @transform_2(%arg0: i32, %arg1: i32) -> (i32, i32) {
    %c0_i32 = arith.constant 0 : i32
    %c0_i32_0 = arith.constant 0 : i32
    %c0_i32_1 = arith.constant 0 : i32
    return %c0_i32, %c0_i32_0 : i32, i32
  }
  func.func @transform_3(%arg0: i32, %arg1: i32) -> (i32, i32) {
    %c0_i32 = arith.constant 0 : i32
    %c0_i32_0 = arith.constant 0 : i32
    %c0_i32_1 = arith.constant 0 : i32
    return %c0_i32, %c0_i32_0 : i32, i32
  }
  func.func @transform_4(%arg0: i32, %arg1: i32) -> (i32, i32) {
    %c0_i32 = arith.constant 0 : i32
    %c0_i32_0 = arith.constant 0 : i32
    %c0_i32_1 = arith.constant 0 : i32
    return %c0_i32, %c0_i32_0 : i32, i32
  }
  func.func @transform_5(%arg0: i32, %arg1: i32) -> (i32, i32) {
    %c0_i32 = arith.constant 0 : i32
    %c0_i32_0 = arith.constant 0 : i32
    %c0_i32_1 = arith.constant 0 : i32
    return %c0_i32, %c0_i32_0 : i32, i32
  }
  func.func @transform_6(%arg0: i32, %arg1: i32) -> (i32, i32) {
    %c0_i32 = arith.constant 0 : i32
    %c0_i32_0 = arith.constant 0 : i32
    %c0_i32_1 = arith.constant 0 : i32
    return %c0_i32, %c0_i32_0 : i32, i32
  }
  func.func @transform_7(%arg0: i32, %arg1: i32) -> (i32, i32) {
    %c0_i32 = arith.constant 0 : i32
    %c0_i32_0 = arith.constant 0 : i32
    return %arg0, %c0_i32 : i32, i32
  }
}

</mosaic_0001>

<llo_original>
// kernel: faster_rcnn_head.1
$region0: #{faster_rcnn_head.1}
  #allocation0 [shape = 'u32[]', space=smem, size = 0x4, offset = 0x4, fixed_abs, tag = 'smem constant byte address 0x4 - core index']
  #allocation1 [shape = 'u32[144,128]{1,0:T(1,128)}', space=vmem, size = 0x12000, scoped, tag = 'internal scratch']
  #allocation2 [shape = 'f32[16,256]{1,0:T(8,128)}', space=vmem, size = 0x4000, scoped, tag = 'scratch operand']
  %s0 = inlined_call_operand.hbm [shape: bf16[16,2048], index: 0, kind: input, shape index: {}]
  %s1 = inlined_call_operand.hbm [shape: bf16[2048,256], index: 1, kind: input, shape index: {}]
  %s2 = inlined_call_operand.hbm [shape: f32[1,256], index: 2, kind: input, shape index: {}]
  %s3 = inlined_call_operand.hbm [shape: bf16[256,256], index: 3, kind: input, shape index: {}]
  %s4 = inlined_call_operand.hbm [shape: f32[1,256], index: 4, kind: input, shape index: {}]
  %s5 = inlined_call_operand.hbm [shape: bf16[256,128], index: 5, kind: input, shape index: {}]
  %s6 = inlined_call_operand.hbm [shape: f32[1,128], index: 6, kind: input, shape index: {}]
  %s7 = inlined_call_operand.hbm [shape: f32[16,128], index: 7, kind: output, shape index: {}]
  %s8 = sld [smem:[#allocation0]]
  $region97: #{faster_rcnn_head.1} parent=0
    _
  %s10 = ssub.s32 1, %s8
  %s11 = scalar_select 0, %s10, %s8
  $region1: #{faster_rcnn_head.1} parent=0
    #allocation3 [shape = 'u8[32768]{0}', space=vmem, size = 0x8000, scoped, tag = 'input window, operand 0']
    #allocation4 [shape = 's32[2]{0}', space=sflag, size = 0x8, scoped, tag = 'scoped memory for faster_rcnn_head.1']
    #allocation5 [shape = 's32[2]{0}', space=sflag, size = 0x8, scoped, tag = 'scoped memory for faster_rcnn_head.1']
    #allocation6 [shape = 'u8[524288]{0}', space=vmem, size = 0x80000, scoped, tag = 'input window, operand 1']
    #allocation7 [shape = 's32[2]{0}', space=sflag, size = 0x8, scoped, tag = 'scoped memory for faster_rcnn_head.1']
    #allocation8 [shape = 'u8[1024]{0}', space=vmem, size = 0x400, scoped, tag = 'input window, operand 2, single buffered']
    #allocation9 [shape = 'u8[131072]{0}', space=vmem, size = 0x20000, scoped, tag = 'input window, operand 3, single buffered']
    #allocation10 [shape = 's32[1]{0}', space=sflag, size = 0x4, scoped, tag = 'scoped memory for faster_rcnn_head.1']
    #allocation11 [shape = 'u8[1024]{0}', space=vmem, size = 0x400, scoped, tag = 'input window, operand 4, single buffered']
    #allocation12 [shape = 'u8[65536]{0}', space=vmem, size = 0x10000, scoped, tag = 'input window, operand 5, single buffered']
    #allocation13 [shape = 's32[1]{0}', space=sflag, size = 0x4, scoped, tag = 'scoped memory for faster_rcnn_head.1']
    #allocation14 [shape = 'u8[512]{0}', space=vmem, size = 0x400, scoped, tag = 'input window, operand 6, single buffered']
    #allocation15 [shape = 'u8[8192]{0}', space=vmem, size = 0x2000, scoped, tag = 'output window, operand 0, single buffered']
    %12 = vsyncpa [#allocation4], 0
    %s13 = scalar_lea.sflag [#allocation4], 1
    %14 = vsyncpa %s13, 0
    %15 = vsyncpa [#allocation7], 0
    %s16 = scalar_lea.sflag [#allocation7], 1
    %17 = vsyncpa %s16, 0
    %18 = vsyncpa [#allocation10], 0
    %19 = vsyncpa [#allocation13], 0
    %20 = vsyncpa [#allocation5], 0
    loop: start=0, step=1, limit=6
    $region2: #{faster_rcnn_head.1} parent=1 // loop_pre_header
      _
    $region3: #{faster_rcnn_head.1} parent=1 // loop_header
      %s22 = sphi 0, %s26
      %p23 = scmp.ge.s32.totalorder %s22, 6
      %s29 = sphi 0, %s41
      %s30 = sphi 0, %s37
      %s31 = sphi 0, %s29
      %s32 = sphi 0, %s30
      %s33 = sphi 0, %s31
      %s34 = sphi 0, %s32
      %s46 = sphi 0, %s48
      %s49 = sphi 0, %s46
      %s50 = sphi 0, %s49
      %s66 = sphi 0, %s50
      %s72 = sphi 0, %s74
      %s75 = sphi 0, %s72
      %s76 = sphi 0, %s75
      %s92 = sphi 0, %s76
      %s96 = sphi 0, %s96
      %s98 = sphi 0, %s96
      %s99 = sphi 0, %s98
      %s113 = sphi 0, %s99
      %s117 = sphi 0, %s117
      %s119 = sphi 0, %s117
      %s120 = sphi 0, %s119
      %s134 = sphi 0, %s120
      %s138 = sphi 0, %s138
      %s140 = sphi 0, %s138
      %s141 = sphi 0, %s140
      %s155 = sphi 0, %s141
      %s159 = sphi 0, %s159
      %s161 = sphi 0, %s159
      %s162 = sphi 0, %s161
      %s176 = sphi 0, %s162
      %s180 = sphi 0, %s180
      %s182 = sphi 0, %s180
      %s183 = sphi 0, %s182
      %s197 = sphi 0, %s183
      %s203 = sphi 0, %s205
      %s206 = sphi 0, %s203
      %s207 = sphi 0, %s206
      %s223 = sphi 0, %s207
    $region4: #{faster_rcnn_head.1} parent=1 // loop_header_branch
      %25 = sbr.rel (%p23) target = $region8
    $region5: #{faster_rcnn_head.1} parent=1 // loop_body
      %s27 = ssub.s32 %s22, 1
      %s28 = ssub.s32 %s22, 2
      %s35 = sadd.s32 1, %s30
      %p36 = scmp.ge.s32.totalorder %s35, 4
      %s37 = scalar_select %p36, 0, %s35
      %s38 = sadd.s32 1, %s29
      %s39 = scalar_select %p36, %s38, %s29
      %p40 = scmp.ge.s32.totalorder %s39, 1
      %s41 = scalar_select %p40, 0, %s39
      %s42 = ssub.s32 %s29, %s41
      %s43 = ssub.s32 %s30, %s37
      %s44 = sor.u32 %s42, %s43
      %p45 = scmp.eq.s32.totalorder %s44, 0
      %s47 = sadd.s32 %s46, 1
      %s48 = scalar_select %p45, %s46, %s47
      %p51 = pneg %p45
      %p52 = scmp.eq.s32.totalorder %s22, 3
      %p53 = por %p51, %p52
      %p54 = scmp.ne.s32.totalorder %s46, %s49
      %p55 = scmp.eq.s32.totalorder %s22, 0
      %p56 = por %p54, %p55
      %p57 = scmp.ne.s32.totalorder %s46, %s49
      %p58 = scmp.eq.s32.totalorder %s27, 3
      %p59 = por %p57, %p58
      %p60 = scmp.ne.s32.totalorder %s49, %s50
      %p61 = scmp.eq.s32.totalorder %s27, 0
      %p62 = por %p60, %p61
      %p63 = scmp.ne.s32.totalorder %s49, %s50
      %p64 = scmp.eq.s32.totalorder %s28, 3
      %p65 = por %p63, %p64
      %p67 = scmp.ne.s32.totalorder %s50, %s66
      %p68 = scmp.eq.s32.totalorder %s28, 0
      %p69 = por %p67, %p68
      %s70 = ssub.s32 %s30, %s37
      %p71 = scmp.eq.s32.totalorder %s70, 0
      %s73 = sadd.s32 %s72, 1
      %s74 = scalar_select %p71, %s72, %s73
      %p77 = pneg %p71
      %p78 = scmp.eq.s32.totalorder %s22, 3
      %p79 = por %p77, %p78
      %p80 = scmp.ne.s32.totalorder %s72, %s75
      %p81 = scmp.eq.s32.totalorder %s22, 0
      %p82 = por %p80, %p81
      %p83 = scmp.ne.s32.totalorder %s72, %s75
      %p84 = scmp.eq.s32.totalorder %s27, 3
      %p85 = por %p83, %p84
      %p86 = scmp.ne.s32.totalorder %s75, %s76
      %p87 = scmp.eq.s32.totalorder %s27, 0
      %p88 = por %p86, %p87
      %p89 = scmp.ne.s32.totalorder %s75, %s76
      %p90 = scmp.eq.s32.totalorder %s28, 3
      %p91 = por %p89, %p90
      %p93 = scmp.ne.s32.totalorder %s76, %s92
      %p94 = scmp.eq.s32.totalorder %s28, 0
      %p95 = por %p93, %p94
      %s97 = sadd.s32 %s96, 1
      %p100 = scmp.eq.s32.totalorder %s22, 3
      %p101 = scmp.ne.s32.totalorder %s96, %s98
      %p102 = scmp.eq.s32.totalorder %s22, 0
      %p103 = por %p101, %p102
      %p104 = scmp.ne.s32.totalorder %s96, %s98
      %p105 = scmp.eq.s32.totalorder %s27, 3
      %p106 = por %p104, %p105
      %p107 = scmp.ne.s32.totalorder %s98, %s99
      %p108 = scmp.eq.s32.totalorder %s27, 0
      %p109 = por %p107, %p108
      %p110 = scmp.ne.s32.totalorder %s98, %s99
      %p111 = scmp.eq.s32.totalorder %s28, 3
      %p112 = por %p110, %p111
      %p114 = scmp.ne.s32.totalorder %s99, %s113
      %p115 = scmp.eq.s32.totalorder %s28, 0
      %p116 = por %p114, %p115
      %s118 = sadd.s32 %s117, 1
      %p121 = scmp.eq.s32.totalorder %s22, 3
      %p122 = scmp.ne.s32.totalorder %s117, %s119
      %p123 = scmp.eq.s32.totalorder %s22, 0
      %p124 = por %p122, %p123
      %p125 = scmp.ne.s32.totalorder %s117, %s119
      %p126 = scmp.eq.s32.totalorder %s27, 3
      %p127 = por %p125, %p126
      %p128 = scmp.ne.s32.totalorder %s119, %s120
      %p129 = scmp.eq.s32.totalorder %s27, 0
      %p130 = por %p128, %p129
      %p131 = scmp.ne.s32.totalorder %s119, %s120
      %p132 = scmp.eq.s32.totalorder %s28, 3
      %p133 = por %p131, %p132
      %p135 = scmp.ne.s32.totalorder %s120, %s134
      %p136 = scmp.eq.s32.totalorder %s28, 0
      %p137 = por %p135, %p136
      %s139 = sadd.s32 %s138, 1
      %p142 = scmp.eq.s32.totalorder %s22, 3
      %p143 = scmp.ne.s32.totalorder %s138, %s140
      %p144 = scmp.eq.s32.totalorder %s22, 0
      %p145 = por %p143, %p144
      %p146 = scmp.ne.s32.totalorder %s138, %s140
      %p147 = scmp.eq.s32.totalorder %s27, 3
      %p148 = por %p146, %p147
      %p149 = scmp.ne.s32.totalorder %s140, %s141
      %p150 = scmp.eq.s32.totalorder %s27, 0
      %p151 = por %p149, %p150
      %p152 = scmp.ne.s32.totalorder %s140, %s141
      %p153 = scmp.eq.s32.totalorder %s28, 3
      %p154 = por %p152, %p153
      %p156 = scmp.ne.s32.totalorder %s141, %s155
      %p157 = scmp.eq.s32.totalorder %s28, 0
      %p158 = por %p156, %p157
      %s160 = sadd.s32 %s159, 1
      %p163 = scmp.eq.s32.totalorder %s22, 3
      %p164 = scmp.ne.s32.totalorder %s159, %s161
      %p165 = scmp.eq.s32.totalorder %s22, 0
      %p166 = por %p164, %p165
      %p167 = scmp.ne.s32.totalorder %s159, %s161
      %p168 = scmp.eq.s32.totalorder %s27, 3
      %p169 = por %p167, %p168
      %p170 = scmp.ne.s32.totalorder %s161, %s162
      %p171 = scmp.eq.s32.totalorder %s27, 0
      %p172 = por %p170, %p171
      %p173 = scmp.ne.s32.totalorder %s161, %s162
      %p174 = scmp.eq.s32.totalorder %s28, 3
      %p175 = por %p173, %p174
      %p177 = scmp.ne.s32.totalorder %s162, %s176
      %p178 = scmp.eq.s32.totalorder %s28, 0
      %p179 = por %p177, %p178
      %s181 = sadd.s32 %s180, 1
      %p184 = scmp.eq.s32.totalorder %s22, 3
      %p185 = scmp.ne.s32.totalorder %s180, %s182
      %p186 = scmp.eq.s32.totalorder %s22, 0
      %p187 = por %p185, %p186
      %p188 = scmp.ne.s32.totalorder %s180, %s182
      %p189 = scmp.eq.s32.totalorder %s27, 3
      %p190 = por %p188, %p189
      %p191 = scmp.ne.s32.totalorder %s182, %s183
      %p192 = scmp.eq.s32.totalorder %s27, 0
      %p193 = por %p191, %p192
      %p194 = scmp.ne.s32.totalorder %s182, %s183
      %p195 = scmp.eq.s32.totalorder %s28, 3
      %p196 = por %p194, %p195
      %p198 = scmp.ne.s32.totalorder %s183, %s197
      %p199 = scmp.eq.s32.totalorder %s28, 0
      %p200 = por %p198, %p199
      %s201 = ssub.s32 %s29, %s41
      %p202 = scmp.eq.s32.totalorder %s201, 0
      %s204 = sadd.s32 %s203, 1
      %s205 = scalar_select %p202, %s203, %s204
      %p208 = pneg %p202
      %p209 = scmp.eq.s32.totalorder %s22, 3
      %p210 = por %p208, %p209
      %p211 = scmp.ne.s32.totalorder %s203, %s206
      %p212 = scmp.eq.s32.totalorder %s22, 0
      %p213 = por %p211, %p212
      %p214 = scmp.ne.s32.totalorder %s203, %s206
      %p215 = scmp.eq.s32.totalorder %s27, 3
      %p216 = por %p214, %p215
      %p217 = scmp.ne.s32.totalorder %s206, %s207
      %p218 = scmp.eq.s32.totalorder %s27, 0
      %p219 = por %p217, %p218
      %p220 = scmp.ne.s32.totalorder %s206, %s207
      %p221 = scmp.eq.s32.totalorder %s28, 3
      %p222 = por %p220, %p221
      %p224 = scmp.ne.s32.totalorder %s207, %s223
      %p225 = scmp.eq.s32.totalorder %s28, 0
      %p226 = por %p224, %p225
      %p227 = scmp.le.s32.totalorder 1, %s22
      %p228 = scmp.lt.s32.totalorder %s22, 5
      %p229 = pnand %p227, %p228
      %p230 = pneg %p229
      // Predicated region
      $region9: #{faster_rcnn_head.1} parent=5 // pred_check
        _
      $region10: #{faster_rcnn_head.1} parent=5 // pred_check_branch
        %232 = sbr.rel (%p229) target = $region12
      $region11: #{faster_rcnn_head.1} parent=5 // pred_region
        %s233 = ssub.s32 %s22, 1
        // Predicated region
        $region13: #{faster_rcnn_head.1} parent=11 // pred_check
          %p234 = pneg %p109
        $region14: #{faster_rcnn_head.1} parent=11 // pred_check_branch
          %236 = sbr.rel (%p234) target = $region16
        $region15: #{faster_rcnn_head.1} parent=11 // pred_region
          %s238 = ssub.s32 32, 32
          %239 = vsyncadd [#allocation7], %s238
          %s241 = sshll.u32 [#allocation8], 4
          %s242 = int_to_ptr.vmem [resolvable:$true] %s241
          %244 = dma.hbm_to_vmem [thread:$0]  %s2, 32, %s242, [#allocation7]
        $region16: #{faster_rcnn_head.1} parent=11 // pred_fallthru
          _
        // Predicated region
        $region17: #{faster_rcnn_head.1} parent=11 // pred_check
          %p245 = pneg %p130
        $region18: #{faster_rcnn_head.1} parent=11 // pred_check_branch
          %247 = sbr.rel (%p245) target = $region20
        $region19: #{faster_rcnn_head.1} parent=11 // pred_region
          %s249 = ssub.s32 4096, 4096
          %250 = vsyncadd [#allocation10], %s249
          %s251 = sshll.u32 [#allocation9], 4
          %s252 = int_to_ptr.vmem [resolvable:$true] %s251
          %257 = dma.hbm_to_vmem [thread:$0]  %s3, 4096, %s252, [#allocation10], 128, 128, 8
        $region20: #{faster_rcnn_head.1} parent=11 // pred_fallthru
          _
        // Predicated region
        $region21: #{faster_rcnn_head.1} parent=11 // pred_check
          %p258 = pneg %p151
        $region22: #{faster_rcnn_head.1} parent=11 // pred_check_branch
          %260 = sbr.rel (%p258) target = $region24
        $region23: #{faster_rcnn_head.1} parent=11 // pred_region
          %s262 = ssub.s32 32, 32
          %263 = vsyncadd [#allocation10], %s262
          %s265 = sshll.u32 [#allocation11], 4
          %s266 = int_to_ptr.vmem [resolvable:$true] %s265
          %268 = dma.hbm_to_vmem [thread:$0]  %s4, 32, %s266, [#allocation10]
        $region24: #{faster_rcnn_head.1} parent=11 // pred_fallthru
          _
        // Predicated region
        $region25: #{faster_rcnn_head.1} parent=11 // pred_check
          %p269 = pneg %p172
        $region26: #{faster_rcnn_head.1} parent=11 // pred_check_branch
          %271 = sbr.rel (%p269) target = $region28
        $region27: #{faster_rcnn_head.1} parent=11 // pred_region
          %s273 = ssub.s32 2048, 2048
          %274 = vsyncadd [#allocation13], %s273
          %s275 = sshll.u32 [#allocation12], 4
          %s276 = int_to_ptr.vmem [resolvable:$true] %s275
          %281 = dma.hbm_to_vmem [thread:$0]  %s5, 2048, %s276, [#allocation13], 64, 64, 4
        $region28: #{faster_rcnn_head.1} parent=11 // pred_fallthru
          _
        // Predicated region
        $region29: #{faster_rcnn_head.1} parent=11 // pred_check
          %p282 = pneg %p193
        $region30: #{faster_rcnn_head.1} parent=11 // pred_check_branch
          %284 = sbr.rel (%p282) target = $region32
        $region31: #{faster_rcnn_head.1} parent=11 // pred_region
          %s286 = ssub.s32 16, 16
          %287 = vsyncadd [#allocation13], %s286
          %s289 = sshll.u32 [#allocation14], 4
          %s290 = int_to_ptr.vmem [resolvable:$true] %s289
          %292 = dma.hbm_to_vmem [thread:$0]  %s6, 16, %s290, [#allocation13]
        $region32: #{faster_rcnn_head.1} parent=11 // pred_fallthru
          _
      $region12: #{faster_rcnn_head.1} parent=5 // pred_fallthru
        _
      %p293 = scmp.lt.s32.totalorder %s22, 4
      // Predicated region
      $region33: #{faster_rcnn_head.1} parent=5 // pred_check
        %p294 = pneg %p293
      $region34: #{faster_rcnn_head.1} parent=5 // pred_check_branch
        %296 = sbr.rel (%p294) target = $region36
      $region35: #{faster_rcnn_head.1} parent=5 // pred_region
        // Predicated region
        $region37: #{faster_rcnn_head.1} parent=35 // pred_check
          %p297 = pneg %p56
        $region38: #{faster_rcnn_head.1} parent=35 // pred_check_branch
          %299 = sbr.rel (%p297) target = $region40
        $region39: #{faster_rcnn_head.1} parent=35 // pred_region
          %s300 = sand.u32 %s46, 1
          %s301 = scalar_lea.sflag [#allocation4], %s300
          %s302 = sand.u32 %s46, 1
          %s303 = smul.addr %s302, 32
          %s304 = scalar_lea.vmem [#allocation3], %s303
          %s305 = smul.u32 2, %s29
          %s306 = smul.u32 4, %s30
          %s308 = ssub.s32 512, 512
          %309 = vsyncadd %s301, %s308
          %s310 = smul.addr %s305, 16
          %s311 = sadd.s32 %s306, %s310
          %s312 = smul.addr %s311, 64
          %s313 = scalar_lea.hbm %s0, %s312
          %s314 = sshll.u32 %s304, 4
          %s315 = int_to_ptr.vmem [resolvable:$true] %s314
          %320 = dma.hbm_to_vmem [thread:$0]  %s313, 512, %s315, %s301, 1024, 256, 16
        $region40: #{faster_rcnn_head.1} parent=35 // pred_fallthru
          _
        // Predicated region
        $region41: #{faster_rcnn_head.1} parent=35 // pred_check
          %p321 = pneg %p82
        $region42: #{faster_rcnn_head.1} parent=35 // pred_check_branch
          %323 = sbr.rel (%p321) target = $region44
        $region43: #{faster_rcnn_head.1} parent=35 // pred_region
          %s324 = sand.u32 %s22, 1
          %s325 = scalar_lea.sflag [#allocation7], %s324
          %s326 = sand.u32 %s72, 1
          %s327 = smul.addr %s326, 512
          %s328 = scalar_lea.vmem [#allocation6], %s327
          %s329 = smul.u32 64, %s30
          %s331 = ssub.s32 8192, 8192
          %332 = vsyncadd %s325, %s331
          %s333 = smul.addr %s329, 2
          %s334 = smul.addr %s333, 64
          %s335 = scalar_lea.hbm %s1, %s334
          %s336 = sshll.u32 %s328, 4
          %s337 = int_to_ptr.vmem [resolvable:$true] %s336
          %342 = dma.hbm_to_vmem [thread:$0]  %s335, 8192, %s337, %s325, 128, 128, 8
        $region44: #{faster_rcnn_head.1} parent=35 // pred_fallthru
          _
      $region36: #{faster_rcnn_head.1} parent=5 // pred_fallthru
        _
      %p343 = scmp.le.s32.totalorder 1, %s22
      %p344 = scmp.lt.s32.totalorder %s22, 5
      %p345 = pnand %p343, %p344
      %p346 = pneg %p345
      // Predicated region
      $region45: #{faster_rcnn_head.1} parent=5 // pred_check
        _
      $region46: #{faster_rcnn_head.1} parent=5 // pred_check_branch
        %348 = sbr.rel (%p345) target = $region48
      $region47: #{faster_rcnn_head.1} parent=5 // pred_region
        %s349 = ssub.s32 %s22, 1
        %s350 = sand.u32 %s49, 1
        %s351 = scalar_lea.sflag [#allocation4], %s350
        %s352 = sand.u32 %s49, 1
        %s353 = smul.addr %s352, 32
        %s354 = scalar_lea.vmem [#allocation3], %s353
        // Predicated region
        $region49: #{faster_rcnn_head.1} parent=47 // pred_check
          %p355 = pneg %p62
        $region50: #{faster_rcnn_head.1} parent=47 // pred_check_branch
          %357 = sbr.rel (%p355) target = $region52
        $region51: #{faster_rcnn_head.1} parent=47 // pred_region
          %358 = dma.done %s351, 512
        $region52: #{faster_rcnn_head.1} parent=47 // pred_fallthru
          _
        %s359 = sand.u32 %s27, 1
        %s360 = scalar_lea.sflag [#allocation7], %s359
        %s361 = sand.u32 %s75, 1
        %s362 = smul.addr %s361, 512
        %s363 = scalar_lea.vmem [#allocation6], %s362
        // Predicated region
        $region53: #{faster_rcnn_head.1} parent=47 // pred_check
          %p364 = pneg %p88
        $region54: #{faster_rcnn_head.1} parent=47 // pred_check_branch
          %366 = sbr.rel (%p364) target = $region56
        $region55: #{faster_rcnn_head.1} parent=47 // pred_region
          %367 = dma.done %s360, 8192
        $region56: #{faster_rcnn_head.1} parent=47 // pred_fallthru
          _
        // Predicated region
        $region57: #{faster_rcnn_head.1} parent=47 // pred_check
          %p368 = pneg %p109
        $region58: #{faster_rcnn_head.1} parent=47 // pred_check_branch
          %370 = sbr.rel (%p368) target = $region60
        $region59: #{faster_rcnn_head.1} parent=47 // pred_region
          %371 = dma.done [#allocation7], 32
        $region60: #{faster_rcnn_head.1} parent=47 // pred_fallthru
          _
        // Predicated region
        $region61: #{faster_rcnn_head.1} parent=47 // pred_check
          %p372 = pneg %p130
        $region62: #{faster_rcnn_head.1} parent=47 // pred_check_branch
          %374 = sbr.rel (%p372) target = $region64
        $region63: #{faster_rcnn_head.1} parent=47 // pred_region
          %375 = dma.done [#allocation10], 4096
        $region64: #{faster_rcnn_head.1} parent=47 // pred_fallthru
          _
        // Predicated region
        $region65: #{faster_rcnn_head.1} parent=47 // pred_check
          %p376 = pneg %p151
        $region66: #{faster_rcnn_head.1} parent=47 // pred_check_branch
          %378 = sbr.rel (%p376) target = $region68
        $region67: #{faster_rcnn_head.1} parent=47 // pred_region
          %379 = dma.done [#allocation10], 32
        $region68: #{faster_rcnn_head.1} parent=47 // pred_fallthru
          _
        // Predicated region
        $region69: #{faster_rcnn_head.1} parent=47 // pred_check
          %p380 = pneg %p172
        $region70: #{faster_rcnn_head.1} parent=47 // pred_check_branch
          %382 = sbr.rel (%p380) target = $region72
        $region71: #{faster_rcnn_head.1} parent=47 // pred_region
          %383 = dma.done [#allocation13], 2048
        $region72: #{faster_rcnn_head.1} parent=47 // pred_fallthru
          _
        // Predicated region
        $region73: #{faster_rcnn_head.1} parent=47 // pred_check
          %p384 = pneg %p193
        $region74: #{faster_rcnn_head.1} parent=47 // pred_check_branch
          %386 = sbr.rel (%p384) target = $region76
        $region75: #{faster_rcnn_head.1} parent=47 // pred_region
          %387 = dma.done [#allocation13], 16
        $region76: #{faster_rcnn_head.1} parent=47 // pred_fallthru
          _
        %s388 = sand.u32 %s49, 1
        %s389 = scalar_lea.sflag [#allocation4], %s388
        %s390 = sand.u32 %s49, 1
        %s391 = smul.addr %s390, 32
        %s392 = scalar_lea.vmem [#allocation3], %s391
        %p393 = pneg %p62
        %p394 = pneg %p59
        %s395 = sand.u32 %s27, 1
        %s396 = scalar_lea.sflag [#allocation7], %s395
        %s397 = sand.u32 %s75, 1
        %s398 = smul.addr %s397, 512
        %s399 = scalar_lea.vmem [#allocation6], %s398
        %p400 = pneg %p88
        %p401 = pneg %p85
        %p402 = pneg %p109
        %p403 = pneg %p106
        %p404 = pneg %p130
        %p405 = pneg %p127
        %p406 = pneg %p151
        %p407 = pneg %p148
        %p408 = pneg %p172
        %p409 = pneg %p169
        %p410 = pneg %p193
        %p411 = pneg %p190
        %p412 = pneg %p219
        %p413 = pneg %p216
        %s414 = smul.u32 2, %s31
        %s415 = smul.u32 4, %s32
        %s416 = smul.u32 64, %s32
        %s417 = smul.u32 2, %s31
        %p419 = scmp.eq.s32.totalorder %s32, 0
        // Predicated region
        $region77: #{faster_rcnn_head.1} parent=47 // pred_check
          %p420 = pneg %p419
        $region78: #{faster_rcnn_head.1} parent=47 // pred_check_branch
          %422 = sbr.rel (%p420) target = $region80
        $region79: #{faster_rcnn_head.1} parent=47 // pred_region
          %423 = vst [vmem:[#allocation2] sm:$0xff] 0.0
          %424 = vst [vmem:[#allocation2 + $0x8] sm:$0xff] 0.0
          %425 = vst [vmem:[#allocation2 + $0x10] sm:$0xff] 0.0
          %426 = vst [vmem:[#allocation2 + $0x18] sm:$0xff] 0.0
        $region80: #{faster_rcnn_head.1} parent=47 // pred_fallthru
          _
        %v427 = vld [vmem:[#allocation2] sm:$0xff]
        %v428 = vld [vmem:[#allocation2 + $0x8] sm:$0xff]
        %v429 = vld [vmem:[#allocation2 + $0x10] sm:$0xff]
        %v430 = vld [vmem:[#allocation2 + $0x18] sm:$0xff]
        %v431 = vld [vmem:[%s354] sm:$0xff]
        %v432 = vld [vmem:[%s354 + $0x8] sm:$0xff]
        %v433 = vld [vmem:[%s354 + $0x10] sm:$0xff]
        %v434 = vld [vmem:[%s354 + $0x18] sm:$0xff]
        %v435 = vld [vmem:[%s363] sm:$0xff]
        %v436 = vld [vmem:[%s363 + $0x8] sm:$0xff]
        %v437 = vld [vmem:[%s363 + $0x10] sm:$0xff]
        %v438 = vld [vmem:[%s363 + $0x18] sm:$0xff]
        %v439 = vld [vmem:[%s363 + $0x20] sm:$0xff]
        %v440 = vld [vmem:[%s363 + $0x28] sm:$0xff]
        %v441 = vld [vmem:[%s363 + $0x30] sm:$0xff]
        %v442 = vld [vmem:[%s363 + $0x38] sm:$0xff]
        %v443 = vld [vmem:[%s363 + $0x40] sm:$0xff]
        %v444 = vld [vmem:[%s363 + $0x48] sm:$0xff]
        %v445 = vld [vmem:[%s363 + $0x50] sm:$0xff]
        %v446 = vld [vmem:[%s363 + $0x58] sm:$0xff]
        %v447 = vld [vmem:[%s363 + $0x60] sm:$0xff]
        %v448 = vld [vmem:[%s363 + $0x68] sm:$0xff]
        %v449 = vld [vmem:[%s363 + $0x70] sm:$0xff]
        %v450 = vld [vmem:[%s363 + $0x78] sm:$0xff]
        %v451 = vld [vmem:[%s363 + $0x80] sm:$0xff]
        %v452 = vld [vmem:[%s363 + $0x88] sm:$0xff]
        %v453 = vld [vmem:[%s363 + $0x90] sm:$0xff]
        %v454 = vld [vmem:[%s363 + $0x98] sm:$0xff]
        %v455 = vld [vmem:[%s363 + $0xa0] sm:$0xff]
        %v456 = vld [vmem:[%s363 + $0xa8] sm:$0xff]
        %v457 = vld [vmem:[%s363 + $0xb0] sm:$0xff]
        %v458 = vld [vmem:[%s363 + $0xb8] sm:$0xff]
        %v459 = vld [vmem:[%s363 + $0xc0] sm:$0xff]
        %v460 = vld [vmem:[%s363 + $0xc8] sm:$0xff]
        %v461 = vld [vmem:[%s363 + $0xd0] sm:$0xff]
        %v462 = vld [vmem:[%s363 + $0xd8] sm:$0xff]
        %v463 = vld [vmem:[%s363 + $0xe0] sm:$0xff]
        %v464 = vld [vmem:[%s363 + $0xe8] sm:$0xff]
        %v465 = vld [vmem:[%s363 + $0xf0] sm:$0xff]
        %v466 = vld [vmem:[%s363 + $0xf8] sm:$0xff]
        %v467 = vld [vmem:[%s363 + $0x100] sm:$0xff]
        %v468 = vld [vmem:[%s363 + $0x108] sm:$0xff]
        %v469 = vld [vmem:[%s363 + $0x110] sm:$0xff]
        %v470 = vld [vmem:[%s363 + $0x118] sm:$0xff]
        %v471 = vld [vmem:[%s363 + $0x120] sm:$0xff]
        %v472 = vld [vmem:[%s363 + $0x128] sm:$0xff]
        %v473 = vld [vmem:[%s363 + $0x130] sm:$0xff]
        %v474 = vld [vmem:[%s363 + $0x138] sm:$0xff]
        %v475 = vld [vmem:[%s363 + $0x140] sm:$0xff]
        %v476 = vld [vmem:[%s363 + $0x148] sm:$0xff]
        %v477 = vld [vmem:[%s363 + $0x150] sm:$0xff]
        %v478 = vld [vmem:[%s363 + $0x158] sm:$0xff]
        %v479 = vld [vmem:[%s363 + $0x160] sm:$0xff]
        %v480 = vld [vmem:[%s363 + $0x168] sm:$0xff]
        %v481 = vld [vmem:[%s363 + $0x170] sm:$0xff]
        %v482 = vld [vmem:[%s363 + $0x178] sm:$0xff]
        %v483 = vld [vmem:[%s363 + $0x180] sm:$0xff]
        %v484 = vld [vmem:[%s363 + $0x188] sm:$0xff]
        %v485 = vld [vmem:[%s363 + $0x190] sm:$0xff]
        %v486 = vld [vmem:[%s363 + $0x198] sm:$0xff]
        %v487 = vld [vmem:[%s363 + $0x1a0] sm:$0xff]
        %v488 = vld [vmem:[%s363 + $0x1a8] sm:$0xff]
        %v489 = vld [vmem:[%s363 + $0x1b0] sm:$0xff]
        %v490 = vld [vmem:[%s363 + $0x1b8] sm:$0xff]
        %v491 = vld [vmem:[%s363 + $0x1c0] sm:$0xff]
        %v492 = vld [vmem:[%s363 + $0x1c8] sm:$0xff]
        %v493 = vld [vmem:[%s363 + $0x1d0] sm:$0xff]
        %v494 = vld [vmem:[%s363 + $0x1d8] sm:$0xff]
        %v495 = vld [vmem:[%s363 + $0x1e0] sm:$0xff]
        %v496 = vld [vmem:[%s363 + $0x1e8] sm:$0xff]
        %v497 = vld [vmem:[%s363 + $0x1f0] sm:$0xff]
        %v498 = vld [vmem:[%s363 + $0x1f8] sm:$0xff]
        %v503 = vunpack.c.l.b16 %v431
        %v504 = vunpack.c.h.b16 %v431
        %v505 = vunpack.c.l.b16 %v432
        %v506 = vunpack.c.h.b16 %v432
        %v507 = vunpack.c.l.b16 %v433
        %v508 = vunpack.c.h.b16 %v433
        %v509 = vunpack.c.l.b16 %v434
        %v510 = vunpack.c.h.b16 %v434
        %v511 = vpack.c.b16 %v507, %v503
        %v512 = vpack.c.b16 %v508, %v504
        %v513 = vpack.c.b16 %v509, %v505
        %v514 = vpack.c.b16 %v510, %v506
        %v583 = vunpack.c.l.b16 %v435
        %v584 = vunpack.c.h.b16 %v435
        %v585 = vunpack.c.l.b16 %v436
        %v586 = vunpack.c.h.b16 %v436
        %v587 = vunpack.c.l.b16 %v437
        %v588 = vunpack.c.h.b16 %v437
        %v589 = vunpack.c.l.b16 %v438
        %v590 = vunpack.c.h.b16 %v438
        %v591 = vunpack.c.l.b16 %v439
        %v592 = vunpack.c.h.b16 %v439
        %v593 = vunpack.c.l.b16 %v440
        %v594 = vunpack.c.h.b16 %v440
        %v595 = vunpack.c.l.b16 %v441
        %v596 = vunpack.c.h.b16 %v441
        %v597 = vunpack.c.l.b16 %v442
        %v598 = vunpack.c.h.b16 %v442
        %v599 = vunpack.c.l.b16 %v443
        %v600 = vunpack.c.h.b16 %v443
        %v601 = vunpack.c.l.b16 %v444
        %v602 = vunpack.c.h.b16 %v444
        %v603 = vunpack.c.l.b16 %v445
        %v604 = vunpack.c.h.b16 %v445
        %v605 = vunpack.c.l.b16 %v446
        %v606 = vunpack.c.h.b16 %v446
        %v607 = vunpack.c.l.b16 %v447
        %v608 = vunpack.c.h.b16 %v447
        %v609 = vunpack.c.l.b16 %v448
        %v610 = vunpack.c.h.b16 %v448
        %v611 = vunpack.c.l.b16 %v449
        %v612 = vunpack.c.h.b16 %v449
        %v613 = vunpack.c.l.b16 %v450
        %v614 = vunpack.c.h.b16 %v450
        %v615 = vunpack.c.l.b16 %v451
        %v616 = vunpack.c.h.b16 %v451
        %v617 = vunpack.c.l.b16 %v452
        %v618 = vunpack.c.h.b16 %v452
        %v619 = vunpack.c.l.b16 %v453
        %v620 = vunpack.c.h.b16 %v453
        %v621 = vunpack.c.l.b16 %v454
        %v622 = vunpack.c.h.b16 %v454
        %v623 = vunpack.c.l.b16 %v455
        %v624 = vunpack.c.h.b16 %v455
        %v625 = vunpack.c.l.b16 %v456
        %v626 = vunpack.c.h.b16 %v456
        %v627 = vunpack.c.l.b16 %v457
        %v628 = vunpack.c.h.b16 %v457
        %v629 = vunpack.c.l.b16 %v458
        %v630 = vunpack.c.h.b16 %v458
        %v631 = vunpack.c.l.b16 %v459
        %v632 = vunpack.c.h.b16 %v459
        %v633 = vunpack.c.l.b16 %v460
        %v634 = vunpack.c.h.b16 %v460
        %v635 = vunpack.c.l.b16 %v461
        %v636 = vunpack.c.h.b16 %v461
        %v637 = vunpack.c.l.b16 %v462
        %v638 = vunpack.c.h.b16 %v462
        %v639 = vunpack.c.l.b16 %v463
        %v640 = vunpack.c.h.b16 %v463
        %v641 = vunpack.c.l.b16 %v464
        %v642 = vunpack.c.h.b16 %v464
        %v643 = vunpack.c.l.b16 %v465
        %v644 = vunpack.c.h.b16 %v465
        %v645 = vunpack.c.l.b16 %v466
        %v646 = vunpack.c.h.b16 %v466
        %v647 = vunpack.c.l.b16 %v467
        %v648 = vunpack.c.h.b16 %v467
        %v649 = vunpack.c.l.b16 %v468
        %v650 = vunpack.c.h.b16 %v468
        %v651 = vunpack.c.l.b16 %v469
        %v652 = vunpack.c.h.b16 %v469
        %v653 = vunpack.c.l.b16 %v470
        %v654 = vunpack.c.h.b16 %v470
        %v655 = vunpack.c.l.b16 %v471
        %v656 = vunpack.c.h.b16 %v471
        %v657 = vunpack.c.l.b16 %v472
        %v658 = vunpack.c.h.b16 %v472
        %v659 = vunpack.c.l.b16 %v473
        %v660 = vunpack.c.h.b16 %v473
        %v661 = vunpack.c.l.b16 %v474
        %v662 = vunpack.c.h.b16 %v474
        %v663 = vunpack.c.l.b16 %v475
        %v664 = vunpack.c.h.b16 %v475
        %v665 = vunpack.c.l.b16 %v476
        %v666 = vunpack.c.h.b16 %v476
        %v667 = vunpack.c.l.b16 %v477
        %v668 = vunpack.c.h.b16 %v477
        %v669 = vunpack.c.l.b16 %v478
        %v670 = vunpack.c.h.b16 %v478
        %v671 = vunpack.c.l.b16 %v479
        %v672 = vunpack.c.h.b16 %v479
        %v673 = vunpack.c.l.b16 %v480
        %v674 = vunpack.c.h.b16 %v480
        %v675 = vunpack.c.l.b16 %v481
        %v676 = vunpack.c.h.b16 %v481
        %v677 = vunpack.c.l.b16 %v482
        %v678 = vunpack.c.h.b16 %v482
        %v679 = vunpack.c.l.b16 %v483
        %v680 = vunpack.c.h.b16 %v483
        %v681 = vunpack.c.l.b16 %v484
        %v682 = vunpack.c.h.b16 %v484
        %v683 = vunpack.c.l.b16 %v485
        %v684 = vunpack.c.h.b16 %v485
        %v685 = vunpack.c.l.b16 %v486
        %v686 = vunpack.c.h.b16 %v486
        %v687 = vunpack.c.l.b16 %v487
        %v688 = vunpack.c.h.b16 %v487
        %v689 = vunpack.c.l.b16 %v488
        %v690 = vunpack.c.h.b16 %v488
        %v691 = vunpack.c.l.b16 %v489
        %v692 = vunpack.c.h.b16 %v489
        %v693 = vunpack.c.l.b16 %v490
        %v694 = vunpack.c.h.b16 %v490
        %v695 = vunpack.c.l.b16 %v491
        %v696 = vunpack.c.h.b16 %v491
        %v697 = vunpack.c.l.b16 %v492
        %v698 = vunpack.c.h.b16 %v492
        %v699 = vunpack.c.l.b16 %v493
        %v700 = vunpack.c.h.b16 %v493
        %v701 = vunpack.c.l.b16 %v494
        %v702 = vunpack.c.h.b16 %v494
        %v703 = vunpack.c.l.b16 %v495
        %v704 = vunpack.c.h.b16 %v495
        %v705 = vunpack.c.l.b16 %v496
        %v706 = vunpack.c.h.b16 %v496
        %v707 = vunpack.c.l.b16 %v497
        %v708 = vunpack.c.h.b16 %v497
        %v709 = vunpack.c.l.b16 %v498
        %v710 = vunpack.c.h.b16 %v498
        %v711 = vpack.c.b16 %v585, %v583
        %v712 = vpack.c.b16 %v586, %v584
        %v713 = vpack.c.b16 %v589, %v587
        %v714 = vpack.c.b16 %v590, %v588
        %v715 = vpack.c.b16 %v593, %v591
        %v716 = vpack.c.b16 %v594, %v592
        %v717 = vpack.c.b16 %v597, %v595
        %v718 = vpack.c.b16 %v598, %v596
        %v719 = vpack.c.b16 %v601, %v599
        %v720 = vpack.c.b16 %v602, %v600
        %v721 = vpack.c.b16 %v605, %v603
        %v722 = vpack.c.b16 %v606, %v604
        %v723 = vpack.c.b16 %v609, %v607
        %v724 = vpack.c.b16 %v610, %v608
        %v725 = vpack.c.b16 %v613, %v611
        %v726 = vpack.c.b16 %v614, %v612
        %v727 = vpack.c.b16 %v617, %v615
        %v728 = vpack.c.b16 %v618, %v616
        %v729 = vpack.c.b16 %v621, %v619
        %v730 = vpack.c.b16 %v622, %v620
        %v731 = vpack.c.b16 %v625, %v623
        %v732 = vpack.c.b16 %v626, %v624
        %v733 = vpack.c.b16 %v629, %v627
        %v734 = vpack.c.b16 %v630, %v628
        %v735 = vpack.c.b16 %v633, %v631
        %v736 = vpack.c.b16 %v634, %v632
        %v737 = vpack.c.b16 %v637, %v635
        %v738 = vpack.c.b16 %v638, %v636
        %v739 = vpack.c.b16 %v641, %v639
        %v740 = vpack.c.b16 %v642, %v640
        %v741 = vpack.c.b16 %v645, %v643
        %v742 = vpack.c.b16 %v646, %v644
        %v743 = vpack.c.b16 %v649, %v647
        %v744 = vpack.c.b16 %v650, %v648
        %v745 = vpack.c.b16 %v653, %v651
        %v746 = vpack.c.b16 %v654, %v652
        %v747 = vpack.c.b16 %v657, %v655
        %v748 = vpack.c.b16 %v658, %v656
        %v749 = vpack.c.b16 %v661, %v659
        %v750 = vpack.c.b16 %v662, %v660
        %v751 = vpack.c.b16 %v665, %v663
        %v752 = vpack.c.b16 %v666, %v664
        %v753 = vpack.c.b16 %v669, %v667
        %v754 = vpack.c.b16 %v670, %v668
        %v755 = vpack.c.b16 %v673, %v671
        %v756 = vpack.c.b16 %v674, %v672
        %v757 = vpack.c.b16 %v677, %v675
        %v758 = vpack.c.b16 %v678, %v676
        %v759 = vpack.c.b16 %v681, %v679
        %v760 = vpack.c.b16 %v682, %v680
        %v761 = vpack.c.b16 %v685, %v683
        %v762 = vpack.c.b16 %v686, %v684
        %v763 = vpack.c.b16 %v689, %v687
        %v764 = vpack.c.b16 %v690, %v688
        %v765 = vpack.c.b16 %v693, %v691
        %v766 = vpack.c.b16 %v694, %v692
        %v767 = vpack.c.b16 %v697, %v695
        %v768 = vpack.c.b16 %v698, %v696
        %v769 = vpack.c.b16 %v701, %v699
        %v770 = vpack.c.b16 %v702, %v700
        %v771 = vpack.c.b16 %v705, %v703
        %v772 = vpack.c.b16 %v706, %v704
        %v773 = vpack.c.b16 %v709, %v707
        %v774 = vpack.c.b16 %v710, %v708
        %839 = vmatprep.subr.bf16.mxu0 %v712
        %840 = vmatpush1.bf16.msra.mxu0 %v711
        %841 = vmatprep.subr.bf16.mxu0 %v714
        %842 = vmatpush1.bf16.msra.mxu0 %v713
        %843 = vmatprep.subr.bf16.mxu0 %v716
        %844 = vmatpush1.bf16.msra.mxu0 %v715
        %845 = vmatprep.subr.bf16.mxu0 %v718
        %846 = vmatpush1.bf16.msra.mxu0 %v717
        %847 = vmatprep.subr.bf16.mxu0 %v720
        %848 = vmatpush1.bf16.msra.mxu0 %v719
        %849 = vmatprep.subr.bf16.mxu0 %v722
        %850 = vmatpush1.bf16.msra.mxu0 %v721
        %851 = vmatprep.subr.bf16.mxu0 %v724
        %852 = vmatpush1.bf16.msra.mxu0 %v723
        %853 = vmatprep.subr.bf16.mxu0 %v726
        %854 = vmatpush1.bf16.msra.mxu0 %v725
        %855 = vmatprep.subr.bf16.mxu0 %v728
        %856 = vmatpush1.bf16.msra.mxu0 %v727
        %857 = vmatprep.subr.bf16.mxu0 %v730
        %858 = vmatpush1.bf16.msra.mxu0 %v729
        %859 = vmatprep.subr.bf16.mxu0 %v732
        %860 = vmatpush1.bf16.msra.mxu0 %v731
        %861 = vmatprep.subr.bf16.mxu0 %v734
        %862 = vmatpush1.bf16.msra.mxu0 %v733
        %863 = vmatprep.subr.bf16.mxu0 %v736
        %864 = vmatpush1.bf16.msra.mxu0 %v735
        %865 = vmatprep.subr.bf16.mxu0 %v738
        %866 = vmatpush1.bf16.msra.mxu0 %v737
        %867 = vmatprep.subr.bf16.mxu0 %v740
        %868 = vmatpush1.bf16.msra.mxu0 %v739
        %869 = vmatprep.subr.bf16.mxu0 %v742
        %870 = vmatpush1.bf16.msra.mxu0 %v741
        %871 = vmatprep.mubr.bf16.mxu0 %v512
        %872 = vmatmul.mubr.bf16.gmra.mrb[0].mxu0 %v511
        %v873 = vpop.f32.mrb[0].mxu0
        %v874 = vadd.f32 0.0, %v873
        %v875 = vpop.f32.mrb[0].mxu0
        %v876 = vadd.f32 0.0, %v875
        %v877 = vpop.f32.mrb[0].mxu0
        %v878 = vadd.f32 0.0, %v877
        %v879 = vpop.f32.mrb[0].mxu0
        %v880 = vadd.f32 0.0, %v879
        %881 = vdwg.mxu0
        %882 = vmatprep.subr.bf16.mxu0 %v744
        %883 = vmatpush1.bf16.msra.mxu0 %v743
        %884 = vmatprep.subr.bf16.mxu0 %v746
        %885 = vmatpush1.bf16.msra.mxu0 %v745
        %886 = vmatprep.subr.bf16.mxu0 %v748
        %887 = vmatpush1.bf16.msra.mxu0 %v747
        %888 = vmatprep.subr.bf16.mxu0 %v750
        %889 = vmatpush1.bf16.msra.mxu0 %v749
        %890 = vmatprep.subr.bf16.mxu0 %v752
        %891 = vmatpush1.bf16.msra.mxu0 %v751
        %892 = vmatprep.subr.bf16.mxu0 %v754
        %893 = vmatpush1.bf16.msra.mxu0 %v753
        %894 = vmatprep.subr.bf16.mxu0 %v756
        %895 = vmatpush1.bf16.msra.mxu0 %v755
        %896 = vmatprep.subr.bf16.mxu0 %v758
        %897 = vmatpush1.bf16.msra.mxu0 %v757
        %898 = vmatprep.subr.bf16.mxu0 %v760
        %899 = vmatpush1.bf16.msra.mxu0 %v759
        %900 = vmatprep.subr.bf16.mxu0 %v762
        %901 = vmatpush1.bf16.msra.mxu0 %v761
        %902 = vmatprep.subr.bf16.mxu0 %v764
        %903 = vmatpush1.bf16.msra.mxu0 %v763
        %904 = vmatprep.subr.bf16.mxu0 %v766
        %905 = vmatpush1.bf16.msra.mxu0 %v765
        %906 = vmatprep.subr.bf16.mxu0 %v768
        %907 = vmatpush1.bf16.msra.mxu0 %v767
        %908 = vmatprep.subr.bf16.mxu0 %v770
        %909 = vmatpush1.bf16.msra.mxu0 %v769
        %910 = vmatprep.subr.bf16.mxu0 %v772
        %911 = vmatpush1.bf16.msra.mxu0 %v771
        %912 = vmatprep.subr.bf16.mxu0 %v774
        %913 = vmatpush1.bf16.msra.mxu0 %v773
        %914 = vmatprep.mubr.bf16.mxu0 %v514
        %915 = vmatmul.mubr.bf16.gmra.mrb[0].mxu0 %v513
        %v916 = vpop.f32.mrb[0].mxu0
        %v917 = vadd.f32 %v874, %v916
        %v918 = vpop.f32.mrb[0].mxu0
        %v919 = vadd.f32 %v876, %v918
        %v920 = vpop.f32.mrb[0].mxu0
        %v921 = vadd.f32 %v878, %v920
        %v922 = vpop.f32.mrb[0].mxu0
        %v923 = vadd.f32 %v880, %v922
        %924 = vdwg.mxu0
        %v925 = vadd.f32 %v427, %v917
        %v926 = vadd.f32 %v428, %v919
        %v927 = vadd.f32 %v429, %v921
        %v928 = vadd.f32 %v430, %v923
        %929 = vst [vmem:[#allocation2] sm:$0xff] %v925
        %930 = vst [vmem:[#allocation2 + $0x8] sm:$0xff] %v926
        %931 = vst [vmem:[#allocation2 + $0x10] sm:$0xff] %v927
        %932 = vst [vmem:[#allocation2 + $0x18] sm:$0xff] %v928
        %p933 = scmp.eq.s32.totalorder %s32, 3
        // Predicated region
        $region81: #{faster_rcnn_head.1} parent=47 // pred_check
          %p934 = pneg %p933
        $region82: #{faster_rcnn_head.1} parent=47 // pred_check_branch
          %936 = sbr.rel (%p934) target = $region84
        $region83: #{faster_rcnn_head.1} parent=47 // pred_region
          %v937 = vld [vmem:[#allocation2] sm:$0xff]
          %v938 = vld [vmem:[#allocation2 + $0x8] sm:$0xff]
          %v939 = vld [vmem:[#allocation2 + $0x10] sm:$0xff]
          %v940 = vld [vmem:[#allocation2 + $0x18] sm:$0xff]
          %v941 = vld [vmem:[#allocation8] sm:$0x3]
          %v943 = vlaneseq
          %v944 = vshrl.u32 %v943, 7
          %v945 = vsub.s32 0, %v944
          %v946 = vrot.slane %v941, %v945
          %v947 = vlaneseq
          %v948 = vshrl.u32 %v947, 7
          %v949 = vsub.s32 1, %v948
          %v950 = vrot.slane %v941, %v949
          %v953 = vadd.f32 %v937, %v946
          %v954 = vadd.f32 %v938, %v950
          %v955 = vadd.f32 %v939, %v946
          %v956 = vadd.f32 %v940, %v950
          %v957 = vmax.f32 %v953, 0.0
          %v958 = vmax.f32 %v954, 0.0
          %v959 = vmax.f32 %v955, 0.0
          %v960 = vmax.f32 %v956, 0.0
          %v961 = vpack.c.bf16 %v959, %v957
          %v962 = vpack.c.bf16 %v960, %v958
          %v963 = vld [vmem:[#allocation9] sm:$0xff]
          %v964 = vld [vmem:[#allocation9 + $0x8] sm:$0xff]
          %v965 = vld [vmem:[#allocation9 + $0x10] sm:$0xff]
          %v966 = vld [vmem:[#allocation9 + $0x18] sm:$0xff]
          %v967 = vld [vmem:[#allocation9 + $0x20] sm:$0xff]
          %v968 = vld [vmem:[#allocation9 + $0x28] sm:$0xff]
          %v969 = vld [vmem:[#allocation9 + $0x30] sm:$0xff]
          %v970 = vld [vmem:[#allocation9 + $0x38] sm:$0xff]
          %v971 = vld [vmem:[#allocation9 + $0x40] sm:$0xff]
          %v972 = vld [vmem:[#allocation9 + $0x48] sm:$0xff]
          %v973 = vld [vmem:[#allocation9 + $0x50] sm:$0xff]
          %v974 = vld [vmem:[#allocation9 + $0x58] sm:$0xff]
          %v975 = vld [vmem:[#allocation9 + $0x60] sm:$0xff]
          %v976 = vld [vmem:[#allocation9 + $0x68] sm:$0xff]
          %v977 = vld [vmem:[#allocation9 + $0x70] sm:$0xff]
          %v978 = vld [vmem:[#allocation9 + $0x78] sm:$0xff]
          %v979 = vld [vmem:[#allocation9 + $0x80] sm:$0xff]
          %v980 = vld [vmem:[#allocation9 + $0x88] sm:$0xff]
          %v981 = vld [vmem:[#allocation9 + $0x90] sm:$0xff]
          %v982 = vld [vmem:[#allocation9 + $0x98] sm:$0xff]
          %v983 = vld [vmem:[#allocation9 + $0xa0] sm:$0xff]
          %v984 = vld [vmem:[#allocation9 + $0xa8] sm:$0xff]
          %v985 = vld [vmem:[#allocation9 + $0xb0] sm:$0xff]
          %v986 = vld [vmem:[#allocation9 + $0xb8] sm:$0xff]
          %v987 = vld [vmem:[#allocation9 + $0xc0] sm:$0xff]
          %v988 = vld [vmem:[#allocation9 + $0xc8] sm:$0xff]
          %v989 = vld [vmem:[#allocation9 + $0xd0] sm:$0xff]
          %v990 = vld [vmem:[#allocation9 + $0xd8] sm:$0xff]
          %v991 = vld [vmem:[#allocation9 + $0xe0] sm:$0xff]
          %v992 = vld [vmem:[#allocation9 + $0xe8] sm:$0xff]
          %v993 = vld [vmem:[#allocation9 + $0xf0] sm:$0xff]
          %v994 = vld [vmem:[#allocation9 + $0xf8] sm:$0xff]
          %v995 = vld [vmem:[#allocation11] sm:$0x3]
          %v997 = vlaneseq
          %v998 = vshrl.u32 %v997, 7
          %v999 = vsub.s32 0, %v998
          %v1000 = vrot.slane %v995, %v999
          %v1001 = vlaneseq
          %v1002 = vshrl.u32 %v1001, 7
          %v1003 = vsub.s32 1, %v1002
          %v1004 = vrot.slane %v995, %v1003
          %v1039 = vunpack.c.l.b16 %v963
          %v1040 = vunpack.c.h.b16 %v963
          %v1041 = vunpack.c.l.b16 %v964
          %v1042 = vunpack.c.h.b16 %v964
          %v1043 = vunpack.c.l.b16 %v965
          %v1044 = vunpack.c.h.b16 %v965
          %v1045 = vunpack.c.l.b16 %v966
          %v1046 = vunpack.c.h.b16 %v966
          %v1047 = vunpack.c.l.b16 %v967
          %v1048 = vunpack.c.h.b16 %v967
          %v1049 = vunpack.c.l.b16 %v968
          %v1050 = vunpack.c.h.b16 %v968
          %v1051 = vunpack.c.l.b16 %v969
          %v1052 = vunpack.c.h.b16 %v969
          %v1053 = vunpack.c.l.b16 %v970
          %v1054 = vunpack.c.h.b16 %v970
          %v1055 = vunpack.c.l.b16 %v971
          %v1056 = vunpack.c.h.b16 %v971
          %v1057 = vunpack.c.l.b16 %v972
          %v1058 = vunpack.c.h.b16 %v972
          %v1059 = vunpack.c.l.b16 %v973
          %v1060 = vunpack.c.h.b16 %v973
          %v1061 = vunpack.c.l.b16 %v974
          %v1062 = vunpack.c.h.b16 %v974
          %v1063 = vunpack.c.l.b16 %v975
          %v1064 = vunpack.c.h.b16 %v975
          %v1065 = vunpack.c.l.b16 %v976
          %v1066 = vunpack.c.h.b16 %v976
          %v1067 = vunpack.c.l.b16 %v977
          %v1068 = vunpack.c.h.b16 %v977
          %v1069 = vunpack.c.l.b16 %v978
          %v1070 = vunpack.c.h.b16 %v978
          %v1071 = vunpack.c.l.b16 %v979
          %v1072 = vunpack.c.h.b16 %v979
          %v1073 = vunpack.c.l.b16 %v980
          %v1074 = vunpack.c.h.b16 %v980
          %v1075 = vunpack.c.l.b16 %v981
          %v1076 = vunpack.c.h.b16 %v981
          %v1077 = vunpack.c.l.b16 %v982
          %v1078 = vunpack.c.h.b16 %v982
          %v1079 = vunpack.c.l.b16 %v983
          %v1080 = vunpack.c.h.b16 %v983
          %v1081 = vunpack.c.l.b16 %v984
          %v1082 = vunpack.c.h.b16 %v984
          %v1083 = vunpack.c.l.b16 %v985
          %v1084 = vunpack.c.h.b16 %v985
          %v1085 = vunpack.c.l.b16 %v986
          %v1086 = vunpack.c.h.b16 %v986
          %v1087 = vunpack.c.l.b16 %v987
          %v1088 = vunpack.c.h.b16 %v987
          %v1089 = vunpack.c.l.b16 %v988
          %v1090 = vunpack.c.h.b16 %v988
          %v1091 = vunpack.c.l.b16 %v989
          %v1092 = vunpack.c.h.b16 %v989
          %v1093 = vunpack.c.l.b16 %v990
          %v1094 = vunpack.c.h.b16 %v990
          %v1095 = vunpack.c.l.b16 %v991
          %v1096 = vunpack.c.h.b16 %v991
          %v1097 = vunpack.c.l.b16 %v992
          %v1098 = vunpack.c.h.b16 %v992
          %v1099 = vunpack.c.l.b16 %v993
          %v1100 = vunpack.c.h.b16 %v993
          %v1101 = vunpack.c.l.b16 %v994
          %v1102 = vunpack.c.h.b16 %v994
          %v1103 = vpack.c.b16 %v1041, %v1039
          %v1104 = vpack.c.b16 %v1042, %v1040
          %v1105 = vpack.c.b16 %v1045, %v1043
          %v1106 = vpack.c.b16 %v1046, %v1044
          %v1107 = vpack.c.b16 %v1049, %v1047
          %v1108 = vpack.c.b16 %v1050, %v1048
          %v1109 = vpack.c.b16 %v1053, %v1051
          %v1110 = vpack.c.b16 %v1054, %v1052
          %v1111 = vpack.c.b16 %v1057, %v1055
          %v1112 = vpack.c.b16 %v1058, %v1056
          %v1113 = vpack.c.b16 %v1061, %v1059
          %v1114 = vpack.c.b16 %v1062, %v1060
          %v1115 = vpack.c.b16 %v1065, %v1063
          %v1116 = vpack.c.b16 %v1066, %v1064
          %v1117 = vpack.c.b16 %v1069, %v1067
          %v1118 = vpack.c.b16 %v1070, %v1068
          %v1119 = vpack.c.b16 %v1073, %v1071
          %v1120 = vpack.c.b16 %v1074, %v1072
          %v1121 = vpack.c.b16 %v1077, %v1075
          %v1122 = vpack.c.b16 %v1078, %v1076
          %v1123 = vpack.c.b16 %v1081, %v1079
          %v1124 = vpack.c.b16 %v1082, %v1080
          %v1125 = vpack.c.b16 %v1085, %v1083
          %v1126 = vpack.c.b16 %v1086, %v1084
          %v1127 = vpack.c.b16 %v1089, %v1087
          %v1128 = vpack.c.b16 %v1090, %v1088
          %v1129 = vpack.c.b16 %v1093, %v1091
          %v1130 = vpack.c.b16 %v1094, %v1092
          %v1131 = vpack.c.b16 %v1097, %v1095
          %v1132 = vpack.c.b16 %v1098, %v1096
          %v1133 = vpack.c.b16 %v1101, %v1099
          %v1134 = vpack.c.b16 %v1102, %v1100
          %1167 = vmatprep.subr.bf16.mxu0 %v1104
          %1168 = vmatpush1.bf16.msra.mxu0 %v1103
          %1169 = vmatprep.subr.bf16.mxu0 %v1106
          %1170 = vmatpush1.bf16.msra.mxu0 %v1105
          %1171 = vmatprep.subr.bf16.mxu0 %v1108
          %1172 = vmatpush1.bf16.msra.mxu0 %v1107
          %1173 = vmatprep.subr.bf16.mxu0 %v1110
          %1174 = vmatpush1.bf16.msra.mxu0 %v1109
          %1175 = vmatprep.subr.bf16.mxu0 %v1112
          %1176 = vmatpush1.bf16.msra.mxu0 %v1111
          %1177 = vmatprep.subr.bf16.mxu0 %v1114
          %1178 = vmatpush1.bf16.msra.mxu0 %v1113
          %1179 = vmatprep.subr.bf16.mxu0 %v1116
          %1180 = vmatpush1.bf16.msra.mxu0 %v1115
          %1181 = vmatprep.subr.bf16.mxu0 %v1118
          %1182 = vmatpush1.bf16.msra.mxu0 %v1117
          %1183 = vmatprep.subr.bf16.mxu0 %v1120
          %1184 = vmatpush1.bf16.msra.mxu0 %v1119
          %1185 = vmatprep.subr.bf16.mxu0 %v1122
          %1186 = vmatpush1.bf16.msra.mxu0 %v1121
          %1187 = vmatprep.subr.bf16.mxu0 %v1124
          %1188 = vmatpush1.bf16.msra.mxu0 %v1123
          %1189 = vmatprep.subr.bf16.mxu0 %v1126
          %1190 = vmatpush1.bf16.msra.mxu0 %v1125
          %1191 = vmatprep.subr.bf16.mxu0 %v1128
          %1192 = vmatpush1.bf16.msra.mxu0 %v1127
          %1193 = vmatprep.subr.bf16.mxu0 %v1130
          %1194 = vmatpush1.bf16.msra.mxu0 %v1129
          %1195 = vmatprep.subr.bf16.mxu0 %v1132
          %1196 = vmatpush1.bf16.msra.mxu0 %v1131
          %1197 = vmatprep.subr.bf16.mxu0 %v1134
          %1198 = vmatpush1.bf16.msra.mxu0 %v1133
          %1199 = vmatprep.mubr.bf16.mxu0 %v962
          %1200 = vmatmul.mubr.bf16.gmra.mrb[0].mxu0 %v961
          %v1201 = vpop.f32.mrb[0].mxu0
          %v1202 = vadd.f32 %v1000, %v1201
          %v1203 = vpop.f32.mrb[0].mxu0
          %v1204 = vadd.f32 %v1004, %v1203
          %v1205 = vpop.f32.mrb[0].mxu0
          %v1206 = vadd.f32 %v1000, %v1205
          %v1207 = vpop.f32.mrb[0].mxu0
          %v1208 = vadd.f32 %v1004, %v1207
          %1209 = vdwg.mxu0
          %v1210 = vmax.f32 %v1202, 0.0
          %v1211 = vmax.f32 %v1204, 0.0
          %v1212 = vmax.f32 %v1206, 0.0
          %v1213 = vmax.f32 %v1208, 0.0
          %v1214 = vpack.c.bf16 %v1212, %v1210
          %v1215 = vpack.c.bf16 %v1213, %v1211
          %v1216 = vld [vmem:[#allocation12] sm:$0xf]
          %v1217 = vld [vmem:[#allocation12 + $0x4] sm:$0xf]
          %v1218 = vld [vmem:[#allocation12 + $0x8] sm:$0xf]
          %v1219 = vld [vmem:[#allocation12 + $0xc] sm:$0xf]
          %v1220 = vld [vmem:[#allocation12 + $0x10] sm:$0xf]
          %v1221 = vld [vmem:[#allocation12 + $0x14] sm:$0xf]
          %v1222 = vld [vmem:[#allocation12 + $0x18] sm:$0xf]
          %v1223 = vld [vmem:[#allocation12 + $0x1c] sm:$0xf]
          %v1224 = vld [vmem:[#allocation12 + $0x20] sm:$0xf]
          %v1225 = vld [vmem:[#allocation12 + $0x24] sm:$0xf]
          %v1226 = vld [vmem:[#allocation12 + $0x28] sm:$0xf]
          %v1227 = vld [vmem:[#allocation12 + $0x2c] sm:$0xf]
          %v1228 = vld [vmem:[#allocation12 + $0x30] sm:$0xf]
          %v1229 = vld [vmem:[#allocation12 + $0x34] sm:$0xf]
          %v1230 = vld [vmem:[#allocation12 + $0x38] sm:$0xf]
          %v1231 = vld [vmem:[#allocation12 + $0x3c] sm:$0xf]
          %v1232 = vld [vmem:[#allocation12 + $0x40] sm:$0xf]
          %v1233 = vld [vmem:[#allocation12 + $0x44] sm:$0xf]
          %v1234 = vld [vmem:[#allocation12 + $0x48] sm:$0xf]
          %v1235 = vld [vmem:[#allocation12 + $0x4c] sm:$0xf]
          %v1236 = vld [vmem:[#allocation12 + $0x50] sm:$0xf]
          %v1237 = vld [vmem:[#allocation12 + $0x54] sm:$0xf]
          %v1238 = vld [vmem:[#allocation12 + $0x58] sm:$0xf]
          %v1239 = vld [vmem:[#allocation12 + $0x5c] sm:$0xf]
          %v1240 = vld [vmem:[#allocation12 + $0x60] sm:$0xf]
          %v1241 = vld [vmem:[#allocation12 + $0x64] sm:$0xf]
          %v1242 = vld [vmem:[#allocation12 + $0x68] sm:$0xf]
          %v1243 = vld [vmem:[#allocation12 + $0x6c] sm:$0xf]
          %v1244 = vld [vmem:[#allocation12 + $0x70] sm:$0xf]
          %v1245 = vld [vmem:[#allocation12 + $0x74] sm:$0xf]
          %v1246 = vld [vmem:[#allocation12 + $0x78] sm:$0xf]
          %v1247 = vld [vmem:[#allocation12 + $0x7c] sm:$0xf]
          %v1248 = vld [vmem:[#allocation14] sm:$0x1]
          %v1250 = vlaneseq
          %v1251 = vshrl.u32 %v1250, 7
          %v1252 = vsub.s32 0, %v1251
          %v1253 = vrot.slane %v1248, %v1252
          %v1287 = vunpack.c.l.b16 %v1216
          %v1288 = vunpack.c.l.b16 %v1217
          %v1289 = vunpack.c.l.b16 %v1218
          %v1290 = vunpack.c.l.b16 %v1219
          %v1291 = vunpack.c.l.b16 %v1220
          %v1292 = vunpack.c.l.b16 %v1221
          %v1293 = vunpack.c.l.b16 %v1222
          %v1294 = vunpack.c.l.b16 %v1223
          %v1295 = vunpack.c.l.b16 %v1224
          %v1296 = vunpack.c.l.b16 %v1225
          %v1297 = vunpack.c.l.b16 %v1226
          %v1298 = vunpack.c.l.b16 %v1227
          %v1299 = vunpack.c.l.b16 %v1228
          %v1300 = vunpack.c.l.b16 %v1229
          %v1301 = vunpack.c.l.b16 %v1230
          %v1302 = vunpack.c.l.b16 %v1231
          %v1303 = vunpack.c.l.b16 %v1232
          %v1304 = vunpack.c.l.b16 %v1233
          %v1305 = vunpack.c.l.b16 %v1234
          %v1306 = vunpack.c.l.b16 %v1235
          %v1307 = vunpack.c.l.b16 %v1236
          %v1308 = vunpack.c.l.b16 %v1237
          %v1309 = vunpack.c.l.b16 %v1238
          %v1310 = vunpack.c.l.b16 %v1239
          %v1311 = vunpack.c.l.b16 %v1240
          %v1312 = vunpack.c.l.b16 %v1241
          %v1313 = vunpack.c.l.b16 %v1242
          %v1314 = vunpack.c.l.b16 %v1243
          %v1315 = vunpack.c.l.b16 %v1244
          %v1316 = vunpack.c.l.b16 %v1245
          %v1317 = vunpack.c.l.b16 %v1246
          %v1318 = vunpack.c.l.b16 %v1247
          %v1319 = vpack.c.b16 %v1288, %v1287
          %v1320 = vpack.c.b16 %v1290, %v1289
          %v1321 = vpack.c.b16 %v1292, %v1291
          %v1322 = vpack.c.b16 %v1294, %v1293
          %v1323 = vpack.c.b16 %v1296, %v1295
          %v1324 = vpack.c.b16 %v1298, %v1297
          %v1325 = vpack.c.b16 %v1300, %v1299
          %v1326 = vpack.c.b16 %v1302, %v1301
          %v1327 = vpack.c.b16 %v1304, %v1303
          %v1328 = vpack.c.b16 %v1306, %v1305
          %v1329 = vpack.c.b16 %v1308, %v1307
          %v1330 = vpack.c.b16 %v1310, %v1309
          %v1331 = vpack.c.b16 %v1312, %v1311
          %v1332 = vpack.c.b16 %v1314, %v1313
          %v1333 = vpack.c.b16 %v1316, %v1315
          %v1334 = vpack.c.b16 %v1318, %v1317
          %1351 = vmatprep.subr.bf16.mxu0 0
          %1352 = vmatpush1.bf16.msra.mxu0 %v1319
          %1353 = vmatprep.subr.bf16.mxu0 0
          %1354 = vmatpush1.bf16.msra.mxu0 %v1320
          %1355 = vmatprep.subr.bf16.mxu0 0
          %1356 = vmatpush1.bf16.msra.mxu0 %v1321
          %1357 = vmatprep.subr.bf16.mxu0 0
          %1358 = vmatpush1.bf16.msra.mxu0 %v1322
          %1359 = vmatprep.subr.bf16.mxu0 0
          %1360 = vmatpush1.bf16.msra.mxu0 %v1323
          %1361 = vmatprep.subr.bf16.mxu0 0
          %1362 = vmatpush1.bf16.msra.mxu0 %v1324
          %1363 = vmatprep.subr.bf16.mxu0 0
          %1364 = vmatpush1.bf16.msra.mxu0 %v1325
          %1365 = vmatprep.subr.bf16.mxu0 0
          %1366 = vmatpush1.bf16.msra.mxu0 %v1326
          %1367 = vmatprep.subr.bf16.mxu0 0
          %1368 = vmatpush1.bf16.msra.mxu0 %v1327
          %1369 = vmatprep.subr.bf16.mxu0 0
          %1370 = vmatpush1.bf16.msra.mxu0 %v1328
          %1371 = vmatprep.subr.bf16.mxu0 0
          %1372 = vmatpush1.bf16.msra.mxu0 %v1329
          %1373 = vmatprep.subr.bf16.mxu0 0
          %1374 = vmatpush1.bf16.msra.mxu0 %v1330
          %1375 = vmatprep.subr.bf16.mxu0 0
          %1376 = vmatpush1.bf16.msra.mxu0 %v1331
          %1377 = vmatprep.subr.bf16.mxu0 0
          %1378 = vmatpush1.bf16.msra.mxu0 %v1332
          %1379 = vmatprep.subr.bf16.mxu0 0
          %1380 = vmatpush1.bf16.msra.mxu0 %v1333
          %1381 = vmatprep.subr.bf16.mxu0 0
          %1382 = vmatpush1.bf16.msra.mxu0 %v1334
          %1383 = vmatprep.mubr.bf16.mxu0 %v1215
          %1384 = vmatmul.mubr.bf16.gmra.mrb[0].mxu0 %v1214
          %v1385 = vpop.f32.mrb[0].mxu0
          %v1386 = vadd.f32 %v1253, %v1385
          %v1387 = vpop.f32.mrb[0].mxu0
          %v1388 = vpop.f32.mrb[0].mxu0
          %v1389 = vadd.f32 %v1253, %v1388
          %v1390 = vpop.f32.mrb[0].mxu0
          %1391 = vdwg.mxu0
          %v1392 = vlaneseq
          %v1393 = vand.u32 %v1392, 127
          %vm1394 = vcmp.lt.s32.totalorder %v1393, 5
          %v1395 = vsel %vm1394, %v1386, -inf
          %v1396 = vsel %vm1394, %v1389, -inf
          %1397 = vmax.xlane.f32.xlu0 %v1395
          %v1398 = vpop.xlane.xlu0 %1397
          %1399 = vmax.xlane.f32.xlu0 %v1396
          %v1400 = vpop.xlane.xlu0 %1399
          %v1401 = vsub.f32 %v1395, %v1398
          %v1402 = vsub.f32 %v1396, %v1400
          %v1403 = vmul.f32 %v1401, 1.442695
          %v1404 = vpow.pop %v1403
          %v1405 = vmul.f32 %v1402, 1.442695
          %v1406 = vpow.pop %v1405
          %v1407 = vsel %vm1394, %v1404, 0.0
          %v1408 = vsel %vm1394, %v1406, 0.0
          %1409 = vadd.xlane.f32.xlu0 %v1407
          %v1410 = vpop.xlane.xlu0 %1409
          %1411 = vadd.xlane.f32.xlu0 %v1408
          %v1412 = vpop.xlane.xlu0 %1411
          %v1413 = vrcp.pop %v1410
          %v1414 = vrcp.pop %v1412
          %v1415 = vmul.f32 %v1407, %v1413
          %v1416 = vmul.f32 %v1408, %v1414
          %v1417 = vsel %vm1394, %v1415, %v1386
          %v1418 = vsel %vm1394, %v1416, %v1389
          %1419 = vst [vmem:[#allocation15] sm:$0xff] %v1417
          %1420 = vst [vmem:[#allocation15 + $0x8] sm:$0xff] %v1418
        $region84: #{faster_rcnn_head.1} parent=47 // pred_fallthru
          _
        // Predicated region
        $region85: #{faster_rcnn_head.1} parent=47 // pred_check
          %p1421 = pneg %p216
        $region86: #{faster_rcnn_head.1} parent=47 // pred_check_branch
          %1423 = sbr.rel (%p1421) target = $region88
        $region87: #{faster_rcnn_head.1} parent=47 // pred_region
          %s1424 = smul.u32 2, %s31
          %s1426 = ssub.s32 256, 256
          %1427 = vsyncadd [#allocation5], %s1426
          %s1428 = smul.addr %s1424, 128
          %s1429 = scalar_lea.hbm %s7, %s1428
          %s1430 = sshll.u32 [#allocation15], 4
          %s1431 = int_to_ptr.vmem [resolvable:$true] %s1430
          %1436 = dma.vmem_to_hbm [thread:$0]  %s1431, 256, %s1429, [#allocation5], 128, 128, 8
        $region88: #{faster_rcnn_head.1} parent=47 // pred_fallthru
          _
        // Predicated region
        $region89: #{faster_rcnn_head.1} parent=47 // pred_check
          %p1437 = pneg %p216
        $region90: #{faster_rcnn_head.1} parent=47 // pred_check_branch
          %1439 = sbr.rel (%p1437) target = $region92
        $region91: #{faster_rcnn_head.1} parent=47 // pred_region
          %1440 = dma.done [#allocation5], 256
        $region92: #{faster_rcnn_head.1} parent=47 // pred_fallthru
          _
      $region48: #{faster_rcnn_head.1} parent=5 // pred_fallthru
        _
      %p1441 = scmp.le.s32.totalorder 2, %s22
      // Predicated region
      $region93: #{faster_rcnn_head.1} parent=5 // pred_check
        %p1442 = pneg %p1441
      $region94: #{faster_rcnn_head.1} parent=5 // pred_check_branch
        %1444 = sbr.rel (%p1442) target = $region96
      $region95: #{faster_rcnn_head.1} parent=5 // pred_region
        %s1445 = ssub.s32 %s22, 2
      $region96: #{faster_rcnn_head.1} parent=5 // pred_fallthru
        _
    $region6: #{faster_rcnn_head.1} parent=1 // loop_footer
      %s26 = sadd.s32 1, %s22
    $region7: #{faster_rcnn_head.1} parent=1 // loop_footer_branch
      %21 = sbr.rel target = $region3
    $region8: #{faster_rcnn_head.1} parent=1 // loop_exit
      _
    %1446 = vsyncpa [#allocation4], 1
    %s1447 = scalar_lea.sflag [#allocation4], 1
    %1448 = vsyncpa %s1447, 1
    %1449 = vsyncpa [#allocation7], 1
    %s1450 = scalar_lea.sflag [#allocation7], 1
    %1451 = vsyncpa %s1450, 1
    %1452 = vsyncpa [#allocation10], 1
    %1453 = vsyncpa [#allocation13], 1
    %1454 = vsyncpa [#allocation5], 1
    %s1455 = scalar_lea.sflag [#allocation5], 1
    %1456 = vsyncpa %s1455, 1

</llo_original>
